<compile_context>
chip_gen: v6e
topology: v6e:2x2x1
jax: 0.10.0
libtpu: 0.0.40
codegen_flags: <defaults>
</compile_context>

<pallas_src>
import jax
import jax.numpy as jnp
from jax import lax
from jax.experimental import pallas as pl
from jax.experimental.pallas import tpu as pltpu

KSIZE = 8       # SpatialGate Conv1d kernel size
PAD_LEFT = 3    # PyTorch padding='same' for k=8: left = (k-1)//2 = 3, right = 4
BN_EPS = 1e-5


def _cdiv(a, b):
    return -(-a // b)


def _vmem_budget_bytes():
    """Per-TensorCore VMEM budget, with a conservative fallback (v7x-safe)."""
    cap = None
    try:
        info = pltpu.get_tpu_info()
        cap = getattr(info, "vmem_capacity_bytes", None)
    except Exception:
        cap = None
    if not cap:
        cap = 64 * 1024 * 1024          # v7x per-TC VMEM (smallest of the fleet)
    return int(cap) * 3 // 4            # leave headroom for compiler scratch


def _choose_tiling(B, C, L, out_itemsize, budget_bytes):
    """Pick the batch tile tb and the padded batch size b_pad."""
    # Per batch row: double-buffered f32 input tile (both passes), double-
    # buffered output tile, plus the small per-row (C,) / (L,) vectors.
    per_row = 2 * 4 * C * L + 2 * out_itemsize * C * L + 16 * (C + L)
    tb_cap = max(1, budget_bytes // max(per_row, 1))
    if B <= 8:
        return B, B                      # tiny batch: one whole-batch block
    tb = min(tb_cap, _cdiv(B, 2))        # >= 2 grid steps -> v7x megacore sharding
    tb = max(8, (tb // 8) * 8)           # multiple of 8 keeps 2-D blocks tileable
    b_pad = _cdiv(B, tb) * tb
    return tb, b_pad


# -----------------------------------------------------------------------------
# Pass 1: channel gate + channel pool + spatial conv (pre-BN).
# -----------------------------------------------------------------------------
def _pass1_kernel(x_ref, w1_ref, b1_ref, w2_ref, b2_ref, cw_ref,
                  scale_ref, conv_ref):
    """
    x_ref     : (tb, C, L) VMEM  NCL input tile
    w1_ref    : (C, H)     VMEM  Linear1 weight (transposed), f32
    b1_ref    : (1, H)     VMEM  Linear1 bias
    w2_ref    : (H, C)     VMEM  Linear2 weight (transposed), f32
    b2_ref    : (1, C)     VMEM  Linear2 bias
    cw_ref    : (17,)      SMEM  [w_max[0:8], w_mean[0:8], conv_bias]
    scale_ref : (tb, C)    VMEM  channel-attention sigmoid scale (f32)
    conv_ref  : (tb, L)    VMEM  spatial-conv output, pre-BN (f32)
    """
    x = x_ref[...].astype(jnp.float32)                       # (tb, C, L)
    tb, C, L = x.shape

    # ---- ChannelGate: avg/max pool over L, shared 2-layer MLP ---------------
    avg_p = jnp.mean(x, axis=2)                              # (tb, C) = avg_pool1d(x, L)
    max_p = jnp.max(x, axis=2)                               # (tb, C) = max_pool1d(x, L)

    def mlp(p):
        h = jnp.dot(p, w1_ref[...], preferred_element_type=jnp.float32) + b1_ref[...]
        h = jnp.maximum(h, 0.0)                              # ReLU
        return jnp.dot(h, w2_ref[...], preferred_element_type=jnp.float32) + b2_ref[...]

    ch_scale = jax.nn.sigmoid(mlp(avg_p) + mlp(max_p))       # (tb, C)
    scale_ref[...] = ch_scale

    # ---- SpatialGate: ChannelPool + Conv1d(2->1, k=8, padding='same') -------
    xc = x * ch_scale[:, :, None]                            # (tb, C, L), never hits HBM
    ch_max = jnp.max(xc, axis=1)                             # (tb, L) channel 0 of ChannelPool
    ch_mean = jnp.mean(xc, axis=1)                           # (tb, L) channel 1 of ChannelPool

    # conv[l] = bias + sum_t w_max[t]*in_max[l+t-3] + w_mean[t]*in_mean[l+t-3]
    # implemented as 8 static roll + masked FMA taps (XLU + VPU; no MXU, no
    # O(L^2) Toeplitz matrix).
    lane = lax.broadcasted_iota(jnp.int32, (tb, L), 1)
    conv = jnp.zeros((tb, L), jnp.float32) + cw_ref[2 * KSIZE]   # conv bias
    for t in range(KSIZE):
        s = t - PAD_LEFT                                     # source offset: in[l + s]
        if s == 0:
            m_sh, a_sh = ch_max, ch_mean
        else:
            r = (-s) % L                                     # rolled[l] = in[(l + s) mod L]
            m_sh = pltpu.roll(ch_max, shift=r, axis=1)
            a_sh = pltpu.roll(ch_mean, shift=r, axis=1)
        tap = cw_ref[t] * m_sh + cw_ref[KSIZE + t] * a_sh
        valid = jnp.logical_and(lane + s >= 0, lane + s < L)  # zero padding at the edges
        conv = conv + jnp.where(valid, tap, 0.0)
    conv_ref[...] = conv


# -----------------------------------------------------------------------------
# Pass 2: BatchNorm (batch stats, folded) + ReLU + sigmoid spatial gate + write.
# -----------------------------------------------------------------------------
def _pass2_kernel(x_ref, scale_ref, conv_ref, s2_ref, o_ref):
    """
    x_ref     : (tb, C, L) VMEM  NCL input tile
    scale_ref : (tb, C)    VMEM  channel-attention scale
    conv_ref  : (tb, L)    VMEM  conv output (pre-BN)
    s2_ref    : (2,)       SMEM  [bn_scale, bn_shift] (batch stats + affine folded)
    o_ref     : (tb, C, L) VMEM  output tile (NCL)
    """
    bn = conv_ref[...] * s2_ref[0] + s2_ref[1]               # (tb, L)
    sp_scale = jax.nn.sigmoid(jnp.maximum(bn, 0.0))          # ReLU then sigmoid
    x = x_ref[...].astype(jnp.float32)                       # (tb, C, L)
    out = x * scale_ref[...][:, :, None] * sp_scale[:, None, :]
    o_ref[...] = out.astype(o_ref.dtype)


# -----------------------------------------------------------------------------
# Wrapper
# -----------------------------------------------------------------------------
@jax.jit
def cbam_forward(x, w1, b1, w2, b2, conv_w, conv_b, bn_gamma, bn_beta):
    """CBAM forward.  x: (B, C, L) (PyTorch NCL layout).  Params in PyTorch shapes."""
    B, C, L = x.shape
    H = w1.shape[0]
    out_dtype = x.dtype

    budget = _vmem_budget_bytes()
    tb, b_pad = _choose_tiling(B, C, L, jnp.dtype(out_dtype).itemsize, budget)
    nb = b_pad // tb
    vmem_limit = int(min(budget, 100 * 1024 * 1024))

    xp = x if b_pad == B else jnp.pad(x, ((0, b_pad - B), (0, 0), (0, 0)))

    # Parameter plumbing (scalar/layout prep only — no tensor compute hoisted).
    w1_t = jnp.transpose(w1).astype(jnp.float32)             # (C, H)
    w2_t = jnp.transpose(w2).astype(jnp.float32)             # (H, C)
    b1_r = b1.reshape(1, H).astype(jnp.float32)
    b2_r = b2.reshape(1, C).astype(jnp.float32)
    cw2 = conv_w.reshape(2, KSIZE).astype(jnp.float32)
    cw = jnp.concatenate([cw2[0], cw2[1],
                          conv_b.astype(jnp.float32).reshape(1)])   # (17,)

    # ---- pass 1: channel gate + channel pool + spatial conv -----------------
    scale, conv = pl.pallas_call(
        _pass1_kernel,
        grid=(nb,),
        in_specs=[
            pl.BlockSpec((tb, C, L), lambda b: (b, 0, 0)),
            pl.BlockSpec((C, H), lambda b: (0, 0)),
            pl.BlockSpec((1, H), lambda b: (0, 0)),
            pl.BlockSpec((H, C), lambda b: (0, 0)),
            pl.BlockSpec((1, C), lambda b: (0, 0)),
            pl.BlockSpec(memory_space=pltpu.MemorySpace.SMEM),
        ],
        out_specs=[
            pl.BlockSpec((tb, C), lambda b: (b, 0)),
            pl.BlockSpec((tb, L), lambda b: (b, 0)),
        ],
        out_shape=[
            jax.ShapeDtypeStruct((b_pad, C), jnp.float32),
            jax.ShapeDtypeStruct((b_pad, L), jnp.float32),
        ],
        compiler_params=pltpu.CompilerParams(
            dimension_semantics=("parallel",),
            vmem_limit_bytes=vmem_limit),
    )(xp, w1_t, b1_r, w2_t, b2_r, cw)

    # BatchNorm1d(1) train-mode batch statistics over the tiny (B, L) conv
    # output, in plain JAX (two-pass mean/var avoids E[x^2]-E[x]^2 cancellation
    # and keeps the pass-1 grid fully parallel).
    conv_valid = conv[:B]
    mu = jnp.mean(conv_valid)
    var = jnp.mean(jnp.square(conv_valid - mu))              # biased variance (PyTorch normalization)
    bn_a = bn_gamma.astype(jnp.float32) * lax.rsqrt(var + BN_EPS)
    bn_b = bn_beta.astype(jnp.float32) - mu * bn_a
    s2 = jnp.stack([bn_a, bn_b])                             # (2,) SMEM scalars

    # ---- pass 2: BN + ReLU + sigmoid spatial gate + output write ------------
    out = pl.pallas_call(
        _pass2_kernel,
        grid=(nb,),
        in_specs=[
            pl.BlockSpec((tb, C, L), lambda b: (b, 0, 0)),
            pl.BlockSpec((tb, C), lambda b: (b, 0)),
            pl.BlockSpec((tb, L), lambda b: (b, 0)),
            pl.BlockSpec(memory_space=pltpu.MemorySpace.SMEM),
        ],
        out_specs=pl.BlockSpec((tb, C, L), lambda b: (b, 0, 0)),
        out_shape=jax.ShapeDtypeStruct((b_pad, C, L), out_dtype),
        compiler_params=pltpu.CompilerParams(
            dimension_semantics=("parallel",),
            vmem_limit_bytes=vmem_limit),
    )(xp, scale, conv, s2)

    return out if b_pad == B else out[:B]


# -----------------------------------------------------------------------------
# Deterministic synthetic parameters matching the PyTorch module shapes.
# -----------------------------------------------------------------------------
def init_params(key, gate_channels, reduction_ratio=16):
    C = gate_channels
    H = max(C // reduction_ratio, 1)
    k1, k2, k3, k4, k5, k6 = jax.random.split(key, 6)
    w1 = jax.random.normal(k1, (H, C), jnp.float32) * 0.1    # nn.Linear(C, H).weight
    b1 = jax.random.normal(k2, (H,), jnp.float32) * 0.1
    w2 = jax.random.normal(k3, (C, H), jnp.float32) * 0.1    # nn.Linear(H, C).weight
    b2 = jax.random.normal(k4, (C,), jnp.float32) * 0.1
    conv_w = jax.random.normal(k5, (2, KSIZE), jnp.float32) * 0.2   # Conv1d(2,1,8).weight[0]
    conv_b = jax.random.normal(k6, (), jnp.float32) * 0.1
    bn_gamma = jnp.array(1.0, jnp.float32)                   # BatchNorm1d(1) affine init
    bn_beta = jnp.array(0.0, jnp.float32)
    return w1, b1, w2, b2, conv_w, conv_b, bn_gamma, bn_beta


def cbam_reference(x, w1, b1, w2, b2, conv_w, conv_b, bn_gamma, bn_beta):
    """Pure-JAX reference of the PyTorch forward (train-mode BatchNorm)."""
    B, C, L = x.shape
    avg_p = jnp.mean(x, axis=2)
    max_p = jnp.max(x, axis=2)
    mlp = lambda p: jnp.maximum(p @ w1.T + b1, 0.0) @ w2.T + b2
    scale = jax.nn.sigmoid(mlp(avg_p) + mlp(max_p))
    xc = x * scale[:, :, None]
    ch_max = jnp.max(xc, axis=1)
    ch_mean = jnp.mean(xc, axis=1)
    pm = jnp.pad(ch_max, ((0, 0), (PAD_LEFT, KSIZE - 1 - PAD_LEFT)))
    pa = jnp.pad(ch_mean, ((0, 0), (PAD_LEFT, KSIZE - 1 - PAD_LEFT)))
    w = conv_w.reshape(2, KSIZE)
    conv = jnp.zeros((B, L), jnp.float32) + conv_b
    for t in range(KSIZE):
        conv = conv + w[0, t] * pm[:, t:t + L] + w[1, t] * pa[:, t:t + L]
    mu = jnp.mean(conv)
    var = jnp.mean(jnp.square(conv - mu))
    bn = (conv - mu) * lax.rsqrt(var + BN_EPS) * bn_gamma + bn_beta
    sp = jax.nn.sigmoid(jnp.maximum(bn, 0.0))
    return xc * sp[:, None, :]


if __name__ == "__main__":
    B, C, L = 2, 32, 16          # gate_channels=32, reduction_ratio=16 -> hidden=2
    key = jax.random.PRNGKey(0)
    kx, kp = jax.random.split(key)
    x = jax.random.normal(kx, (B, C, L), jnp.float32)
    params = init_params(kp, gate_channels=C, reduction_ratio=16)

    out = cbam_forward(x, *params)
    out = jax.block_until_ready(out)

    assert out.shape == (B, C, L)
    assert bool(jnp.all(jnp.isfinite(out)))

    ref = cbam_reference(x, *params)
    err = float(jnp.max(jnp.abs(out - ref)))
    assert err < 1e-2, f"max abs error {err}"
    print("KERNEL_OK")
</pallas_src>

<mosaic_0001>
module attributes {stable_mosaic.version = 11 : i64} {
  func.func @_pass2_kernel(%arg0: i32, %arg1: memref<2x32x16xf32, #tpu.memory_space<vmem>>, %arg2: memref<2x32xf32, #tpu.memory_space<vmem>>, %arg3: memref<2x16xf32, #tpu.memory_space<vmem>>, %arg4: memref<2xf32, #tpu.memory_space<smem>>, %arg5: memref<2x32x16xf32, #tpu.memory_space<vmem>>) attributes {dimension_semantics = [#tpu.dimension_semantics<parallel>], iteration_bounds = array<i64: 1>, scalar_prefetch = 0 : i64, scratch_operands = 0 : i64, tpu.core_type = #tpu.core_type<tc>, window_params = [{transform_indices = @transform_0, window_bounds = array<i64: 2, 32, 16>}, {transform_indices = @transform_1, window_bounds = array<i64: 2, 32>}, {transform_indices = @transform_2, window_bounds = array<i64: 2, 16>}, {transform_indices = @transform_3, window_bounds = array<i64: 2>}, {transform_indices = @transform_4, window_bounds = array<i64: 2, 32, 16>}]} {
    %c0 = arith.constant 0 : index
    %c0_0 = arith.constant 0 : index
    %0 = vector.load %arg3[%c0, %c0_0] : memref<2x16xf32, #tpu.memory_space<vmem>>, vector<2x16xf32>
    %c0_1 = arith.constant 0 : index
    %1 = memref.load %arg4[%c0_1] : memref<2xf32, #tpu.memory_space<smem>>
    %2 = vector.broadcast %1 : f32 to vector<2x16xf32>
    %3 = arith.mulf %0, %2 : vector<2x16xf32>
    %c1 = arith.constant 1 : index
    %4 = memref.load %arg4[%c1] : memref<2xf32, #tpu.memory_space<smem>>
    %5 = vector.broadcast %4 : f32 to vector<2x16xf32>
    %6 = arith.addf %3, %5 : vector<2x16xf32>
    %cst = arith.constant 0.000000e+00 : f32
    %7 = vector.broadcast %cst : f32 to vector<2x16xf32>
    %8 = arith.maximumf %6, %7 : vector<2x16xf32>
    %9 = arith.negf %8 : vector<2x16xf32>
    %10 = math.exp %9 : vector<2x16xf32>
    %cst_2 = arith.constant 1.000000e+00 : f32
    %11 = vector.broadcast %cst_2 : f32 to vector<2x16xf32>
    %12 = arith.addf %11, %10 : vector<2x16xf32>
    %13 = arith.divf %11, %12 : vector<2x16xf32>
    %c0_3 = arith.constant 0 : index
    %c0_4 = arith.constant 0 : index
    %c0_5 = arith.constant 0 : index
    %14 = vector.load %arg1[%c0_3, %c0_4, %c0_5] : memref<2x32x16xf32, #tpu.memory_space<vmem>>, vector<2x32x16xf32>
    %c0_6 = arith.constant 0 : index
    %c0_7 = arith.constant 0 : index
    %15 = vector.load %arg2[%c0_6, %c0_7] : memref<2x32xf32, #tpu.memory_space<vmem>>, vector<2x32xf32>
    %16 = vector.shape_cast %15 : vector<2x32xf32> to vector<2x32x1xf32>
    %17 = vector.broadcast %16 : vector<2x32x1xf32> to vector<2x32x16xf32>
    %18 = arith.mulf %14, %17 : vector<2x32x16xf32>
    %19 = vector.shape_cast %13 : vector<2x16xf32> to vector<2x1x16xf32>
    %20 = vector.broadcast %19 : vector<2x1x16xf32> to vector<2x32x16xf32>
    %21 = arith.mulf %18, %20 : vector<2x32x16xf32>
    %c0_8 = arith.constant 0 : index
    %c0_9 = arith.constant 0 : index
    %c0_10 = arith.constant 0 : index
    %22 = vector.load %arg5[%c0_8, %c0_9, %c0_10] : memref<2x32x16xf32, #tpu.memory_space<vmem>>, vector<2x32x16xf32>
    tpu.vector_store %arg5[%c0_8, %c0_9, %c0_10], %21 {strides = array<i32>} : memref<2x32x16xf32, #tpu.memory_space<vmem>>, vector<2x32x16xf32>,
    return
  }
  func.func @transform_0(%arg0: i32) -> (i32, i32, i32) {
    %c0_i32 = arith.constant 0 : i32
    %c0_i32_0 = arith.constant 0 : i32
    %c0_i32_1 = arith.constant 0 : i32
    return %arg0, %c0_i32, %c0_i32_0 : i32, i32, i32
  }
  func.func @transform_1(%arg0: i32) -> (i32, i32) {
    %c0_i32 = arith.constant 0 : i32
    %c0_i32_0 = arith.constant 0 : i32
    return %arg0, %c0_i32 : i32, i32
  }
  func.func @transform_2(%arg0: i32) -> (i32, i32) {
    %c0_i32 = arith.constant 0 : i32
    %c0_i32_0 = arith.constant 0 : i32
    return %arg0, %c0_i32 : i32, i32
  }
  func.func @transform_3(%arg0: i32) -> i32 {
    %c0_i32 = arith.constant 0 : i32
    %c0_i32_0 = arith.constant 0 : i32
    return %c0_i32 : i32
  }
  func.func @transform_4(%arg0: i32) -> (i32, i32, i32) {
    %c0_i32 = arith.constant 0 : i32
    %c0_i32_0 = arith.constant 0 : i32
    %c0_i32_1 = arith.constant 0 : i32
    return %arg0, %c0_i32, %c0_i32_0 : i32, i32, i32
  }
}

module attributes {stable_mosaic.version = 11 : i64} {
  func.func @_pass1_kernel(%arg0: i32, %arg1: memref<2x32x16xf32, #tpu.memory_space<vmem>>, %arg2: memref<32x2xf32, #tpu.memory_space<vmem>>, %arg3: memref<1x2xf32, #tpu.memory_space<vmem>>, %arg4: memref<2x32xf32, #tpu.memory_space<vmem>>, %arg5: memref<1x32xf32, #tpu.memory_space<vmem>>, %arg6: memref<17xf32, #tpu.memory_space<smem>>, %arg7: memref<2x32xf32, #tpu.memory_space<vmem>>, %arg8: memref<2x16xf32, #tpu.memory_space<vmem>>) attributes {dimension_semantics = [#tpu.dimension_semantics<parallel>], iteration_bounds = array<i64: 1>, scalar_prefetch = 0 : i64, scratch_operands = 0 : i64, tpu.core_type = #tpu.core_type<tc>, window_params = [{transform_indices = @transform_0, window_bounds = array<i64: 2, 32, 16>}, {pipeline_mode = #tpu.pipeline_mode<synchronous>, transform_indices = @transform_1, window_bounds = array<i64: 32, 2>}, {pipeline_mode = #tpu.pipeline_mode<synchronous>, transform_indices = @transform_2, window_bounds = array<i64: 1, 2>}, {pipeline_mode = #tpu.pipeline_mode<synchronous>, transform_indices = @transform_3, window_bounds = array<i64: 2, 32>}, {pipeline_mode = #tpu.pipeline_mode<synchronous>, transform_indices = @transform_4, window_bounds = array<i64: 1, 32>}, {transform_indices = @transform_5, window_bounds = array<i64: 17>}, {transform_indices = @transform_6, window_bounds = array<i64: 2, 32>}, {transform_indices = @transform_7, window_bounds = array<i64: 2, 16>}]} {
    %c0 = arith.constant 0 : index
    %c0_0 = arith.constant 0 : index
    %c0_1 = arith.constant 0 : index
    %0 = vector.load %arg1[%c0, %c0_0, %c0_1] : memref<2x32x16xf32, #tpu.memory_space<vmem>>, vector<2x32x16xf32>
    %cst = arith.constant dense<0.000000e+00> : vector<2x32xf32>
    %1 = vector.multi_reduction <add>, %0, %cst [2] : vector<2x32x16xf32> to vector<2x32xf32>
    %cst_2 = arith.constant 1.600000e+01 : f32
    %2 = vector.broadcast %cst_2 : f32 to vector<2x32xf32>
    %3 = arith.divf %1, %2 : vector<2x32xf32>
    %cst_3 = arith.constant dense<0xFF800000> : vector<2x32xf32>
    %4 = vector.multi_reduction <maximumf>, %0, %cst_3 [2] : vector<2x32x16xf32> to vector<2x32xf32>
    %c0_4 = arith.constant 0 : index
    %c0_5 = arith.constant 0 : index
    %5 = vector.load %arg2[%c0_4, %c0_5] : memref<32x2xf32, #tpu.memory_space<vmem>>, vector<32x2xf32>
    %cst_6 = arith.constant dense<0.000000e+00> : vector<2x2xf32>
    %6 = tpu.matmul %3, %5, %cst_6 {dimension_numbers = #tpu.dot_dimension_numbers<[1], [0], [0], [1], [0, 0, 1, 1], [], []>} : vector<2x32xf32>, vector<32x2xf32>, vector<2x2xf32> -> vector<2x2xf32>
    %c0_7 = arith.constant 0 : index
    %c0_8 = arith.constant 0 : index
    %7 = vector.load %arg3[%c0_7, %c0_8] : memref<1x2xf32, #tpu.memory_space<vmem>>, vector<1x2xf32>
    %8 = vector.broadcast %7 : vector<1x2xf32> to vector<2x2xf32>
    %9 = arith.addf %6, %8 : vector<2x2xf32>
    %cst_9 = arith.constant 0.000000e+00 : f32
    %10 = vector.broadcast %cst_9 : f32 to vector<2x2xf32>
    %11 = arith.maximumf %9, %10 : vector<2x2xf32>
    %c0_10 = arith.constant 0 : index
    %c0_11 = arith.constant 0 : index
    %12 = vector.load %arg4[%c0_10, %c0_11] : memref<2x32xf32, #tpu.memory_space<vmem>>, vector<2x32xf32>
    %cst_12 = arith.constant dense<0.000000e+00> : vector<2x32xf32>
    %13 = tpu.matmul %11, %12, %cst_12 {dimension_numbers = #tpu.dot_dimension_numbers<[1], [0], [0], [1], [0, 0, 1, 1], [], []>} : vector<2x2xf32>, vector<2x32xf32>, vector<2x32xf32> -> vector<2x32xf32>
    %c0_13 = arith.constant 0 : index
    %c0_14 = arith.constant 0 : index
    %14 = vector.load %arg5[%c0_13, %c0_14] : memref<1x32xf32, #tpu.memory_space<vmem>>, vector<1x32xf32>
    %15 = vector.broadcast %14 : vector<1x32xf32> to vector<2x32xf32>
    %16 = arith.addf %13, %15 : vector<2x32xf32>
    %c0_15 = arith.constant 0 : index
    %c0_16 = arith.constant 0 : index
    %17 = vector.load %arg2[%c0_15, %c0_16] : memref<32x2xf32, #tpu.memory_space<vmem>>, vector<32x2xf32>
    %cst_17 = arith.constant dense<0.000000e+00> : vector<2x2xf32>
    %18 = tpu.matmul %4, %17, %cst_17 {dimension_numbers = #tpu.dot_dimension_numbers<[1], [0], [0], [1], [0, 0, 1, 1], [], []>} : vector<2x32xf32>, vector<32x2xf32>, vector<2x2xf32> -> vector<2x2xf32>
    %c0_18 = arith.constant 0 : index
    %c0_19 = arith.constant 0 : index
    %19 = vector.load %arg3[%c0_18, %c0_19] : memref<1x2xf32, #tpu.memory_space<vmem>>, vector<1x2xf32>
    %20 = vector.broadcast %19 : vector<1x2xf32> to vector<2x2xf32>
    %21 = arith.addf %18, %20 : vector<2x2xf32>
    %cst_20 = arith.constant 0.000000e+00 : f32
    %22 = vector.broadcast %cst_20 : f32 to vector<2x2xf32>
    %23 = arith.maximumf %21, %22 : vector<2x2xf32>
    %c0_21 = arith.constant 0 : index
    %c0_22 = arith.constant 0 : index
    %24 = vector.load %arg4[%c0_21, %c0_22] : memref<2x32xf32, #tpu.memory_space<vmem>>, vector<2x32xf32>
    %cst_23 = arith.constant dense<0.000000e+00> : vector<2x32xf32>
    %25 = tpu.matmul %23, %24, %cst_23 {dimension_numbers = #tpu.dot_dimension_numbers<[1], [0], [0], [1], [0, 0, 1, 1], [], []>} : vector<2x2xf32>, vector<2x32xf32>, vector<2x32xf32> -> vector<2x32xf32>
    %c0_24 = arith.constant 0 : index
    %c0_25 = arith.constant 0 : index
    %26 = vector.load %arg5[%c0_24, %c0_25] : memref<1x32xf32, #tpu.memory_space<vmem>>, vector<1x32xf32>
    %27 = vector.broadcast %26 : vector<1x32xf32> to vector<2x32xf32>
    %28 = arith.addf %25, %27 : vector<2x32xf32>
    %29 = arith.addf %16, %28 : vector<2x32xf32>
    %30 = arith.negf %29 : vector<2x32xf32>
    %31 = math.exp %30 : vector<2x32xf32>
    %cst_26 = arith.constant 1.000000e+00 : f32
    %32 = vector.broadcast %cst_26 : f32 to vector<2x32xf32>
    %33 = arith.addf %32, %31 : vector<2x32xf32>
    %34 = arith.divf %32, %33 : vector<2x32xf32>
    %c0_27 = arith.constant 0 : index
    %c0_28 = arith.constant 0 : index
    %35 = vector.load %arg7[%c0_27, %c0_28] : memref<2x32xf32, #tpu.memory_space<vmem>>, vector<2x32xf32>
    tpu.vector_store %arg7[%c0_27, %c0_28], %34 {strides = array<i32>} : memref<2x32xf32, #tpu.memory_space<vmem>>, vector<2x32xf32>,
    %36 = vector.shape_cast %34 : vector<2x32xf32> to vector<2x32x1xf32>
    %37 = vector.broadcast %36 : vector<2x32x1xf32> to vector<2x32x16xf32>
    %38 = arith.mulf %0, %37 : vector<2x32x16xf32>
    %cst_29 = arith.constant dense<0xFF800000> : vector<2x16xf32>
    %39 = vector.multi_reduction <maximumf>, %38, %cst_29 [1] : vector<2x32x16xf32> to vector<2x16xf32>
    %cst_30 = arith.constant dense<0.000000e+00> : vector<2x16xf32>
    %40 = vector.multi_reduction <add>, %38, %cst_30 [1] : vector<2x32x16xf32> to vector<2x16xf32>
    %cst_31 = arith.constant 3.200000e+01 : f32
    %41 = vector.broadcast %cst_31 : f32 to vector<2x16xf32>
    %42 = arith.divf %40, %41 : vector<2x16xf32>
    %43 = tpu.iota {dimensions = array<i32: 1>} : vector<2x16xi32>
    %cst_32 = arith.constant 0.000000e+00 : f32
    %44 = vector.broadcast %cst_32 : f32 to vector<2x16xf32>
    %c16 = arith.constant 16 : index
    %45 = memref.load %arg6[%c16] : memref<17xf32, #tpu.memory_space<smem>>
    %46 = vector.broadcast %45 : f32 to vector<2x16xf32>
    %47 = arith.addf %44, %46 : vector<2x16xf32>
    %c3_i32 = arith.constant 3 : i32
    %48 = tpu.dynamic_rotate %39 by %c3_i32 dim 1 : vector<2x16xf32>, i32 -> vector<2x16xf32>
    %c3_i32_33 = arith.constant 3 : i32
    %49 = tpu.dynamic_rotate %42 by %c3_i32_33 dim 1 : vector<2x16xf32>, i32 -> vector<2x16xf32>
    %c0_34 = arith.constant 0 : index
    %50 = memref.load %arg6[%c0_34] : memref<17xf32, #tpu.memory_space<smem>>
    %51 = vector.broadcast %50 : f32 to vector<2x16xf32>
    %52 = arith.mulf %51, %48 : vector<2x16xf32>
    %c8 = arith.constant 8 : index
    %53 = memref.load %arg6[%c8] : memref<17xf32, #tpu.memory_space<smem>>
    %54 = vector.broadcast %53 : f32 to vector<2x16xf32>
    %55 = arith.mulf %54, %49 : vector<2x16xf32>
    %56 = arith.addf %52, %55 : vector<2x16xf32>
    %c-3_i32 = arith.constant -3 : i32
    %57 = vector.broadcast %c-3_i32 : i32 to vector<2x16xi32>
    %58 = arith.addi %43, %57 : vector<2x16xi32>
    %c0_i32 = arith.constant 0 : i32
    %59 = vector.broadcast %c0_i32 : i32 to vector<2x16xi32>
    %60 = arith.cmpi sge, %58, %59 : vector<2x16xi32>
    %c-3_i32_35 = arith.constant -3 : i32
    %61 = vector.broadcast %c-3_i32_35 : i32 to vector<2x16xi32>
    %62 = arith.addi %43, %61 : vector<2x16xi32>
    %c16_i32 = arith.constant 16 : i32
    %63 = vector.broadcast %c16_i32 : i32 to vector<2x16xi32>
    %64 = arith.cmpi slt, %62, %63 : vector<2x16xi32>
    %65 = arith.andi %60, %64 : vector<2x16xi1>
    %cst_36 = arith.constant 0.000000e+00 : f32
    %66 = vector.broadcast %cst_36 : f32 to vector<2x16xf32>
    %67 = arith.select %65, %56, %66 : vector<2x16xi1>, vector<2x16xf32>
    %68 = arith.addf %47, %67 : vector<2x16xf32>
    %c2_i32 = arith.constant 2 : i32
    %69 = tpu.dynamic_rotate %39 by %c2_i32 dim 1 : vector<2x16xf32>, i32 -> vector<2x16xf32>
    %c2_i32_37 = arith.constant 2 : i32
    %70 = tpu.dynamic_rotate %42 by %c2_i32_37 dim 1 : vector<2x16xf32>, i32 -> vector<2x16xf32>
    %c1 = arith.constant 1 : index
    %71 = memref.load %arg6[%c1] : memref<17xf32, #tpu.memory_space<smem>>
    %72 = vector.broadcast %71 : f32 to vector<2x16xf32>
    %73 = arith.mulf %72, %69 : vector<2x16xf32>
    %c9 = arith.constant 9 : index
    %74 = memref.load %arg6[%c9] : memref<17xf32, #tpu.memory_space<smem>>
    %75 = vector.broadcast %74 : f32 to vector<2x16xf32>
    %76 = arith.mulf %75, %70 : vector<2x16xf32>
    %77 = arith.addf %73, %76 : vector<2x16xf32>
    %c-2_i32 = arith.constant -2 : i32
    %78 = vector.broadcast %c-2_i32 : i32 to vector<2x16xi32>
    %79 = arith.addi %43, %78 : vector<2x16xi32>
    %c0_i32_38 = arith.constant 0 : i32
    %80 = vector.broadcast %c0_i32_38 : i32 to vector<2x16xi32>
    %81 = arith.cmpi sge, %79, %80 : vector<2x16xi32>
    %c-2_i32_39 = arith.constant -2 : i32
    %82 = vector.broadcast %c-2_i32_39 : i32 to vector<2x16xi32>
    %83 = arith.addi %43, %82 : vector<2x16xi32>
    %c16_i32_40 = arith.constant 16 : i32
    %84 = vector.broadcast %c16_i32_40 : i32 to vector<2x16xi32>
    %85 = arith.cmpi slt, %83, %84 : vector<2x16xi32>
    %86 = arith.andi %81, %85 : vector<2x16xi1>
    %cst_41 = arith.constant 0.000000e+00 : f32
    %87 = vector.broadcast %cst_41 : f32 to vector<2x16xf32>
    %88 = arith.select %86, %77, %87 : vector<2x16xi1>, vector<2x16xf32>
    %89 = arith.addf %68, %88 : vector<2x16xf32>
    %c1_i32 = arith.constant 1 : i32
    %90 = tpu.dynamic_rotate %39 by %c1_i32 dim 1 : vector<2x16xf32>, i32 -> vector<2x16xf32>
    %c1_i32_42 = arith.constant 1 : i32
    %91 = tpu.dynamic_rotate %42 by %c1_i32_42 dim 1 : vector<2x16xf32>, i32 -> vector<2x16xf32>
    %c2 = arith.constant 2 : index
    %92 = memref.load %arg6[%c2] : memref<17xf32, #tpu.memory_space<smem>>
    %93 = vector.broadcast %92 : f32 to vector<2x16xf32>
    %94 = arith.mulf %93, %90 : vector<2x16xf32>
    %c10 = arith.constant 10 : index
    %95 = memref.load %arg6[%c10] : memref<17xf32, #tpu.memory_space<smem>>
    %96 = vector.broadcast %95 : f32 to vector<2x16xf32>
    %97 = arith.mulf %96, %91 : vector<2x16xf32>
    %98 = arith.addf %94, %97 : vector<2x16xf32>
    %c-1_i32 = arith.constant -1 : i32
    %99 = vector.broadcast %c-1_i32 : i32 to vector<2x16xi32>
    %100 = arith.addi %43, %99 : vector<2x16xi32>
    %c0_i32_43 = arith.constant 0 : i32
    %101 = vector.broadcast %c0_i32_43 : i32 to vector<2x16xi32>
    %102 = arith.cmpi sge, %100, %101 : vector<2x16xi32>
    %c-1_i32_44 = arith.constant -1 : i32
    %103 = vector.broadcast %c-1_i32_44 : i32 to vector<2x16xi32>
    %104 = arith.addi %43, %103 : vector<2x16xi32>
    %c16_i32_45 = arith.constant 16 : i32
    %105 = vector.broadcast %c16_i32_45 : i32 to vector<2x16xi32>
    %106 = arith.cmpi slt, %104, %105 : vector<2x16xi32>
    %107 = arith.andi %102, %106 : vector<2x16xi1>
    %cst_46 = arith.constant 0.000000e+00 : f32
    %108 = vector.broadcast %cst_46 : f32 to vector<2x16xf32>
    %109 = arith.select %107, %98, %108 : vector<2x16xi1>, vector<2x16xf32>
    %110 = arith.addf %89, %109 : vector<2x16xf32>
    %c3 = arith.constant 3 : index
    %111 = memref.load %arg6[%c3] : memref<17xf32, #tpu.memory_space<smem>>
    %112 = vector.broadcast %111 : f32 to vector<2x16xf32>
    %113 = arith.mulf %112, %39 : vector<2x16xf32>
    %c11 = arith.constant 11 : index
    %114 = memref.load %arg6[%c11] : memref<17xf32, #tpu.memory_space<smem>>
    %115 = vector.broadcast %114 : f32 to vector<2x16xf32>
    %116 = arith.mulf %115, %42 : vector<2x16xf32>
    %117 = arith.addf %113, %116 : vector<2x16xf32>
    %c0_i32_47 = arith.constant 0 : i32
    %118 = vector.broadcast %c0_i32_47 : i32 to vector<2x16xi32>
    %119 = arith.addi %43, %118 : vector<2x16xi32>
    %c0_i32_48 = arith.constant 0 : i32
    %120 = vector.broadcast %c0_i32_48 : i32 to vector<2x16xi32>
    %121 = arith.cmpi sge, %119, %120 : vector<2x16xi32>
    %c0_i32_49 = arith.constant 0 : i32
    %122 = vector.broadcast %c0_i32_49 : i32 to vector<2x16xi32>
    %123 = arith.addi %43, %122 : vector<2x16xi32>
    %c16_i32_50 = arith.constant 16 : i32
    %124 = vector.broadcast %c16_i32_50 : i32 to vector<2x16xi32>
    %125 = arith.cmpi slt, %123, %124 : vector<2x16xi32>
    %126 = arith.andi %121, %125 : vector<2x16xi1>
    %cst_51 = arith.constant 0.000000e+00 : f32
    %127 = vector.broadcast %cst_51 : f32 to vector<2x16xf32>
    %128 = arith.select %126, %117, %127 : vector<2x16xi1>, vector<2x16xf32>
    %129 = arith.addf %110, %128 : vector<2x16xf32>
    %c15_i32 = arith.constant 15 : i32
    %130 = tpu.dynamic_rotate %39 by %c15_i32 dim 1 : vector<2x16xf32>, i32 -> vector<2x16xf32>
    %c15_i32_52 = arith.constant 15 : i32
    %131 = tpu.dynamic_rotate %42 by %c15_i32_52 dim 1 : vector<2x16xf32>, i32 -> vector<2x16xf32>
    %c4 = arith.constant 4 : index
    %132 = memref.load %arg6[%c4] : memref<17xf32, #tpu.memory_space<smem>>
    %133 = vector.broadcast %132 : f32 to vector<2x16xf32>
    %134 = arith.mulf %133, %130 : vector<2x16xf32>
    %c12 = arith.constant 12 : index
    %135 = memref.load %arg6[%c12] : memref<17xf32, #tpu.memory_space<smem>>
    %136 = vector.broadcast %135 : f32 to vector<2x16xf32>
    %137 = arith.mulf %136, %131 : vector<2x16xf32>
    %138 = arith.addf %134, %137 : vector<2x16xf32>
    %c1_i32_53 = arith.constant 1 : i32
    %139 = vector.broadcast %c1_i32_53 : i32 to vector<2x16xi32>
    %140 = arith.addi %43, %139 : vector<2x16xi32>
    %c0_i32_54 = arith.constant 0 : i32
    %141 = vector.broadcast %c0_i32_54 : i32 to vector<2x16xi32>
    %142 = arith.cmpi sge, %140, %141 : vector<2x16xi32>
    %c1_i32_55 = arith.constant 1 : i32
    %143 = vector.broadcast %c1_i32_55 : i32 to vector<2x16xi32>
    %144 = arith.addi %43, %143 : vector<2x16xi32>
    %c16_i32_56 = arith.constant 16 : i32
    %145 = vector.broadcast %c16_i32_56 : i32 to vector<2x16xi32>
    %146 = arith.cmpi slt, %144, %145 : vector<2x16xi32>
    %147 = arith.andi %142, %146 : vector<2x16xi1>
    %cst_57 = arith.constant 0.000000e+00 : f32
    %148 = vector.broadcast %cst_57 : f32 to vector<2x16xf32>
    %149 = arith.select %147, %138, %148 : vector<2x16xi1>, vector<2x16xf32>
    %150 = arith.addf %129, %149 : vector<2x16xf32>
    %c14_i32 = arith.constant 14 : i32
    %151 = tpu.dynamic_rotate %39 by %c14_i32 dim 1 : vector<2x16xf32>, i32 -> vector<2x16xf32>
    %c14_i32_58 = arith.constant 14 : i32
    %152 = tpu.dynamic_rotate %42 by %c14_i32_58 dim 1 : vector<2x16xf32>, i32 -> vector<2x16xf32>
    %c5 = arith.constant 5 : index
    %153 = memref.load %arg6[%c5] : memref<17xf32, #tpu.memory_space<smem>>
    %154 = vector.broadcast %153 : f32 to vector<2x16xf32>
    %155 = arith.mulf %154, %151 : vector<2x16xf32>
    %c13 = arith.constant 13 : index
    %156 = memref.load %arg6[%c13] : memref<17xf32, #tpu.memory_space<smem>>
    %157 = vector.broadcast %156 : f32 to vector<2x16xf32>
    %158 = arith.mulf %157, %152 : vector<2x16xf32>
    %159 = arith.addf %155, %158 : vector<2x16xf32>
    %c2_i32_59 = arith.constant 2 : i32
    %160 = vector.broadcast %c2_i32_59 : i32 to vector<2x16xi32>
    %161 = arith.addi %43, %160 : vector<2x16xi32>
    %c0_i32_60 = arith.constant 0 : i32
    %162 = vector.broadcast %c0_i32_60 : i32 to vector<2x16xi32>
    %163 = arith.cmpi sge, %161, %162 : vector<2x16xi32>
    %c2_i32_61 = arith.constant 2 : i32
    %164 = vector.broadcast %c2_i32_61 : i32 to vector<2x16xi32>
    %165 = arith.addi %43, %164 : vector<2x16xi32>
    %c16_i32_62 = arith.constant 16 : i32
    %166 = vector.broadcast %c16_i32_62 : i32 to vector<2x16xi32>
    %167 = arith.cmpi slt, %165, %166 : vector<2x16xi32>
    %168 = arith.andi %163, %167 : vector<2x16xi1>
    %cst_63 = arith.constant 0.000000e+00 : f32
    %169 = vector.broadcast %cst_63 : f32 to vector<2x16xf32>
    %170 = arith.select %168, %159, %169 : vector<2x16xi1>, vector<2x16xf32>
    %171 = arith.addf %150, %170 : vector<2x16xf32>
    %c13_i32 = arith.constant 13 : i32
    %172 = tpu.dynamic_rotate %39 by %c13_i32 dim 1 : vector<2x16xf32>, i32 -> vector<2x16xf32>
    %c13_i32_64 = arith.constant 13 : i32
    %173 = tpu.dynamic_rotate %42 by %c13_i32_64 dim 1 : vector<2x16xf32>, i32 -> vector<2x16xf32>
    %c6 = arith.constant 6 : index
    %174 = memref.load %arg6[%c6] : memref<17xf32, #tpu.memory_space<smem>>
    %175 = vector.broadcast %174 : f32 to vector<2x16xf32>
    %176 = arith.mulf %175, %172 : vector<2x16xf32>
    %c14 = arith.constant 14 : index
    %177 = memref.load %arg6[%c14] : memref<17xf32, #tpu.memory_space<smem>>
    %178 = vector.broadcast %177 : f32 to vector<2x16xf32>
    %179 = arith.mulf %178, %173 : vector<2x16xf32>
    %180 = arith.addf %176, %179 : vector<2x16xf32>
    %c3_i32_65 = arith.constant 3 : i32
    %181 = vector.broadcast %c3_i32_65 : i32 to vector<2x16xi32>
    %182 = arith.addi %43, %181 : vector<2x16xi32>
    %c0_i32_66 = arith.constant 0 : i32
    %183 = vector.broadcast %c0_i32_66 : i32 to vector<2x16xi32>
    %184 = arith.cmpi sge, %182, %183 : vector<2x16xi32>
    %c3_i32_67 = arith.constant 3 : i32
    %185 = vector.broadcast %c3_i32_67 : i32 to vector<2x16xi32>
    %186 = arith.addi %43, %185 : vector<2x16xi32>
    %c16_i32_68 = arith.constant 16 : i32
    %187 = vector.broadcast %c16_i32_68 : i32 to vector<2x16xi32>
    %188 = arith.cmpi slt, %186, %187 : vector<2x16xi32>
    %189 = arith.andi %184, %188 : vector<2x16xi1>
    %cst_69 = arith.constant 0.000000e+00 : f32
    %190 = vector.broadcast %cst_69 : f32 to vector<2x16xf32>
    %191 = arith.select %189, %180, %190 : vector<2x16xi1>, vector<2x16xf32>
    %192 = arith.addf %171, %191 : vector<2x16xf32>
    %c12_i32 = arith.constant 12 : i32
    %193 = tpu.dynamic_rotate %39 by %c12_i32 dim 1 : vector<2x16xf32>, i32 -> vector<2x16xf32>
    %c12_i32_70 = arith.constant 12 : i32
    %194 = tpu.dynamic_rotate %42 by %c12_i32_70 dim 1 : vector<2x16xf32>, i32 -> vector<2x16xf32>
    %c7 = arith.constant 7 : index
    %195 = memref.load %arg6[%c7] : memref<17xf32, #tpu.memory_space<smem>>
    %196 = vector.broadcast %195 : f32 to vector<2x16xf32>
    %197 = arith.mulf %196, %193 : vector<2x16xf32>
    %c15 = arith.constant 15 : index
    %198 = memref.load %arg6[%c15] : memref<17xf32, #tpu.memory_space<smem>>
    %199 = vector.broadcast %198 : f32 to vector<2x16xf32>
    %200 = arith.mulf %199, %194 : vector<2x16xf32>
    %201 = arith.addf %197, %200 : vector<2x16xf32>
    %c4_i32 = arith.constant 4 : i32
    %202 = vector.broadcast %c4_i32 : i32 to vector<2x16xi32>
    %203 = arith.addi %43, %202 : vector<2x16xi32>
    %c0_i32_71 = arith.constant 0 : i32
    %204 = vector.broadcast %c0_i32_71 : i32 to vector<2x16xi32>
    %205 = arith.cmpi sge, %203, %204 : vector<2x16xi32>
    %c4_i32_72 = arith.constant 4 : i32
    %206 = vector.broadcast %c4_i32_72 : i32 to vector<2x16xi32>
    %207 = arith.addi %43, %206 : vector<2x16xi32>
    %c16_i32_73 = arith.constant 16 : i32
    %208 = vector.broadcast %c16_i32_73 : i32 to vector<2x16xi32>
    %209 = arith.cmpi slt, %207, %208 : vector<2x16xi32>
    %210 = arith.andi %205, %209 : vector<2x16xi1>
    %cst_74 = arith.constant 0.000000e+00 : f32
    %211 = vector.broadcast %cst_74 : f32 to vector<2x16xf32>
    %212 = arith.select %210, %201, %211 : vector<2x16xi1>, vector<2x16xf32>
    %213 = arith.addf %192, %212 : vector<2x16xf32>
    %c0_75 = arith.constant 0 : index
    %c0_76 = arith.constant 0 : index
    %214 = vector.load %arg8[%c0_75, %c0_76] : memref<2x16xf32, #tpu.memory_space<vmem>>, vector<2x16xf32>
    tpu.vector_store %arg8[%c0_75, %c0_76], %213 {strides = array<i32>} : memref<2x16xf32, #tpu.memory_space<vmem>>, vector<2x16xf32>,
    return
  }
  func.func @transform_0(%arg0: i32) -> (i32, i32, i32) {
    %c0_i32 = arith.constant 0 : i32
    %c0_i32_0 = arith.constant 0 : i32
    %c0_i32_1 = arith.constant 0 : i32
    return %arg0, %c0_i32, %c0_i32_0 : i32, i32, i32
  }
  func.func @transform_1(%arg0: i32) -> (i32, i32) {
    %c0_i32 = arith.constant 0 : i32
    %c0_i32_0 = arith.constant 0 : i32
    %c0_i32_1 = arith.constant 0 : i32
    return %c0_i32, %c0_i32_0 : i32, i32
  }
  func.func @transform_2(%arg0: i32) -> (i32, i32) {
    %c0_i32 = arith.constant 0 : i32
    %c0_i32_0 = arith.constant 0 : i32
    %c0_i32_1 = arith.constant 0 : i32
    return %c0_i32, %c0_i32_0 : i32, i32
  }
  func.func @transform_3(%arg0: i32) -> (i32, i32) {
    %c0_i32 = arith.constant 0 : i32
    %c0_i32_0 = arith.constant 0 : i32
    %c0_i32_1 = arith.constant 0 : i32
    return %c0_i32, %c0_i32_0 : i32, i32
  }
  func.func @transform_4(%arg0: i32) -> (i32, i32) {
    %c0_i32 = arith.constant 0 : i32
    %c0_i32_0 = arith.constant 0 : i32
    %c0_i32_1 = arith.constant 0 : i32
    return %c0_i32, %c0_i32_0 : i32, i32
  }
  func.func @transform_5(%arg0: i32) -> i32 {
    %c0_i32 = arith.constant 0 : i32
    %c0_i32_0 = arith.constant 0 : i32
    return %c0_i32 : i32
  }
  func.func @transform_6(%arg0: i32) -> (i32, i32) {
    %c0_i32 = arith.constant 0 : i32
    %c0_i32_0 = arith.constant 0 : i32
    return %arg0, %c0_i32 : i32, i32
  }
  func.func @transform_7(%arg0: i32) -> (i32, i32) {
    %c0_i32 = arith.constant 0 : i32
    %c0_i32_0 = arith.constant 0 : i32
    return %arg0, %c0_i32 : i32, i32
  }
}

</mosaic_0001>

<llo_original>
// kernel: cbam_forward.3
$region0: #{cbam_forward.3}
  #allocation0 [shape = 'u32[]', space=smem, size = 0x4, offset = 0x4, fixed_abs, tag = 'smem constant byte address 0x4 - core index']
  #allocation1 [shape = 'u32[144,128]{1,0:T(1,128)}', space=vmem, size = 0x12000, scoped, tag = 'internal scratch']
  %s0 = inlined_call_operand.vmem [shape: f32[2,32,16], index: 0, kind: input, shape index: {}]
  %s1 = inlined_call_operand.vmem [shape: f32[2,32], index: 1, kind: input, shape index: {}]
  %s2 = inlined_call_operand.vmem [shape: f32[2,16], index: 2, kind: input, shape index: {}]
  %s3 = inlined_call_operand.vmem [shape: f32[2], index: 3, kind: input, shape index: {}]
  %s4 = inlined_call_operand.vmem [shape: f32[2,32,16], index: 4, kind: output, shape index: {}]
  %s5 = sld [smem:[#allocation0]]
  $region30: #{cbam_forward.3} parent=0
    _
  %s7 = ssub.s32 1, %s5
  %s8 = scalar_select 0, %s7, %s5
  $region1: #{cbam_forward.3} parent=0
    #allocation2 [shape = 'u8[512]{0}', space=smem, size = 0x200, scoped, tag = 'input window, operand 3, single buffered']
    #allocation3 [shape = 's32[1]{0}', space=sflag, size = 0x4, scoped, tag = 'scoped memory for cbam_forward.3']
    %9 = vsyncpa [#allocation3], 0
    // Predicated region
    $region2: #{cbam_forward.3} parent=1 // pred_check
      _
    $region3: #{cbam_forward.3} parent=1 // pred_check_branch
      %11 = sbr.rel (0) target = $region5
    $region4: #{cbam_forward.3} parent=1 // pred_region
      _
    $region5: #{cbam_forward.3} parent=1 // pred_fallthru
      _
    // Predicated region
    $region6: #{cbam_forward.3} parent=1 // pred_check
      _
    $region7: #{cbam_forward.3} parent=1 // pred_check_branch
      %13 = sbr.rel (0) target = $region9
    $region8: #{cbam_forward.3} parent=1 // pred_region
      _
    $region9: #{cbam_forward.3} parent=1 // pred_fallthru
      _
    // Predicated region
    $region10: #{cbam_forward.3} parent=1 // pred_check
      _
    $region11: #{cbam_forward.3} parent=1 // pred_check_branch
      %15 = sbr.rel (0) target = $region13
    $region12: #{cbam_forward.3} parent=1 // pred_region
      _
    $region13: #{cbam_forward.3} parent=1 // pred_fallthru
      _
    // Predicated region
    $region14: #{cbam_forward.3} parent=1 // pred_check
      _
    $region15: #{cbam_forward.3} parent=1 // pred_check_branch
      %17 = sbr.rel (0) target = $region17
    $region16: #{cbam_forward.3} parent=1 // pred_region
      %s19 = ssub.s32 16, 16
      %20 = vsyncadd [#allocation3], %s19
      %s22 = sshll.u32 %s3, 4
      %s23 = int_to_ptr.vmem [resolvable:$true] %s22
      %25 = dma.vmem_to_smem %s23, 16, [#allocation2], [#allocation3]
    $region17: #{cbam_forward.3} parent=1 // pred_fallthru
      _
    // Predicated region
    $region18: #{cbam_forward.3} parent=1 // pred_check
      _
    $region19: #{cbam_forward.3} parent=1 // pred_check_branch
      %27 = sbr.rel (0) target = $region21
    $region20: #{cbam_forward.3} parent=1 // pred_region
      %28 = dma.done [#allocation3], 16
    $region21: #{cbam_forward.3} parent=1 // pred_fallthru
      _
    %29 = sfence
    %v30 = vld [vmem:[%s2] sm:$0x3]
    %s31 = sld [smem:[#allocation2]]
    %v32 = vstv %s31
    %v33 = vmul.f32 %v30, %v32
    %s34 = sld [smem:[#allocation2 + $0x1]]
    %v35 = vstv %s34
    %v36 = vadd.f32 %v33, %v35
    %v37 = vmax.f32 %v36, 0.0
    %v38 = vxor.u32 %v37, 2147483648
    %v39 = vmul.f32 %v38, 1.442695
    %v40 = vpow.pop %v39
    %v41 = vadd.f32 %v40, 1.0
    %v42 = vrcp.pop %v41
    %v43 = vmul.f32 1.0, %v42
    %v44 = vld [vmem:[%s0] sm:$0xff]
    %v45 = vld [vmem:[%s0 + $0x8] sm:$0xff]
    %v46 = vld [vmem:[%s0 + $0x10] sm:$0xff]
    %v47 = vld [vmem:[%s0 + $0x18] sm:$0xff]
    %v48 = vld [vmem:[%s0 + $0x20] sm:$0xff]
    %v49 = vld [vmem:[%s0 + $0x28] sm:$0xff]
    %v50 = vld [vmem:[%s0 + $0x30] sm:$0xff]
    %v51 = vld [vmem:[%s0 + $0x38] sm:$0xff]
    %v52 = vld [vmem:[%s1] sm:$0x3]
    %v53 = vlaneseq
    %v54 = vshrl.u32 %v53, 7
    %v55 = vsub.s32 0, %v54
    %v56 = vrot.slane %v52, %v55
    %58 = vbcast.lane.b32.xlu0 %v56, 256
    %v59 = vpop.permute.xlu0 %58
    %s61 = sor.u32 256, 8
    %62 = vbcast.lane.b32.xlu0 %v56, %s61
    %v63 = vpop.permute.xlu0 %62
    %s65 = sor.u32 256, 16
    %66 = vbcast.lane.b32.xlu0 %v56, %s65
    %v67 = vpop.permute.xlu0 %66
    %s69 = sor.u32 256, 24
    %70 = vbcast.lane.b32.xlu0 %v56, %s69
    %v71 = vpop.permute.xlu0 %70
    %v72 = vlaneseq
    %v73 = vshrl.u32 %v72, 7
    %v74 = vsub.s32 1, %v73
    %v75 = vrot.slane %v52, %v74
    %77 = vbcast.lane.b32.xlu0 %v75, 256
    %v78 = vpop.permute.xlu0 %77
    %s80 = sor.u32 256, 8
    %81 = vbcast.lane.b32.xlu0 %v75, %s80
    %v82 = vpop.permute.xlu0 %81
    %s84 = sor.u32 256, 16
    %85 = vbcast.lane.b32.xlu0 %v75, %s84
    %v86 = vpop.permute.xlu0 %85
    %s88 = sor.u32 256, 24
    %89 = vbcast.lane.b32.xlu0 %v75, %s88
    %v90 = vpop.permute.xlu0 %89
    %v91 = vmul.f32 %v44, %v59
    %v92 = vmul.f32 %v45, %v63
    %v93 = vmul.f32 %v46, %v67
    %v94 = vmul.f32 %v47, %v71
    %v95 = vmul.f32 %v48, %v78
    %v96 = vmul.f32 %v49, %v82
    %v97 = vmul.f32 %v50, %v86
    %v98 = vmul.f32 %v51, %v90
    %v101 = vunpack.c.l.s4 1966171168
    %v102 = vunpack.c.0.s8 %v101
    %v103 = vlaneseq
    %v104 = vshrl.u32 %v103, 7
    %v105 = vsub.s32 %v102, %v104
    %v106 = vrot.slane %v43, %v105
    %v107 = vcombine.high %v106, %v106
    %v109 = vunpack.c.l.s4 1966171168
    %v110 = vunpack.c.0.s8 %v109
    %v111 = vlaneseq
    %v112 = vshrl.u32 %v111, 7
    %v113 = vsub.s32 %v110, %v112
    %v114 = vrot.slane %v106, %v113
    %v116 = vunpack.c.l.s4 1966171168
    %v117 = vunpack.c.0.s8 %v116
    %v118 = vlaneseq
    %v119 = vshrl.u32 %v118, 7
    %v120 = vsub.s32 %v117, %v119
    %v121 = vrot.slane %v107, %v120
    %v122 = vlaneseq
    %v123 = vshrl.u32 %v122, 7
    %v124 = vsub.s32 0, %v123
    %v125 = vrot.slane %v114, %v124
    %v126 = vlaneseq
    %v127 = vshrl.u32 %v126, 7
    %v128 = vsub.s32 0, %v127
    %v129 = vrot.slane %v121, %v128
    %v132 = vmul.f32 %v91, %v125
    %v133 = vmul.f32 %v92, %v125
    %v134 = vmul.f32 %v93, %v125
    %v135 = vmul.f32 %v94, %v125
    %v136 = vmul.f32 %v95, %v129
    %v137 = vmul.f32 %v96, %v129
    %v138 = vmul.f32 %v97, %v129
    %v139 = vmul.f32 %v98, %v129
    %vm140 = vcmask 130048
    %141 = vst.msk [vmem:[%s4] sm:$0xff] %vm140, %v132
    %142 = vst.msk [vmem:[%s4 + $0x8] sm:$0xff] %vm140, %v133
    %143 = vst.msk [vmem:[%s4 + $0x10] sm:$0xff] %vm140, %v134
    %144 = vst.msk [vmem:[%s4 + $0x18] sm:$0xff] %vm140, %v135
    %145 = vst.msk [vmem:[%s4 + $0x20] sm:$0xff] %vm140, %v136
    %146 = vst.msk [vmem:[%s4 + $0x28] sm:$0xff] %vm140, %v137
    %147 = vst.msk [vmem:[%s4 + $0x30] sm:$0xff] %vm140, %v138
    %148 = vst.msk [vmem:[%s4 + $0x38] sm:$0xff] %vm140, %v139
    // Predicated region
    $region22: #{cbam_forward.3} parent=1 // pred_check
      _
    $region23: #{cbam_forward.3} parent=1 // pred_check_branch
      %150 = sbr.rel (0) target = $region25
    $region24: #{cbam_forward.3} parent=1 // pred_region
      _
    $region25: #{cbam_forward.3} parent=1 // pred_fallthru
      _
    // Predicated region
    $region26: #{cbam_forward.3} parent=1 // pred_check
      _
    $region27: #{cbam_forward.3} parent=1 // pred_check_branch
      %152 = sbr.rel (0) target = $region29
    $region28: #{cbam_forward.3} parent=1 // pred_region
      _
    $region29: #{cbam_forward.3} parent=1 // pred_fallthru
      _
    %153 = vsyncpa [#allocation3], 1

// kernel: cbam_forward.2
$region0: #{cbam_forward.2}
  #allocation0 [shape = 'u32[]', space=smem, size = 0x4, offset = 0x4, fixed_abs, tag = 'smem constant byte address 0x4 - core index']
  #allocation1 [shape = 'u32[144,128]{1,0:T(1,128)}', space=vmem, size = 0x12000, scoped, tag = 'internal scratch']
  %s0 = inlined_call_operand.vmem [shape: f32[2,32,16], index: 0, kind: input, shape index: {}]
  %s1 = inlined_call_operand.vmem [shape: f32[32,2], index: 1, kind: input, shape index: {}]
  %s2 = inlined_call_operand.vmem [shape: f32[1,2], index: 2, kind: input, shape index: {}]
  %s3 = inlined_call_operand.vmem [shape: f32[2,32], index: 3, kind: input, shape index: {}]
  %s4 = inlined_call_operand.vmem [shape: f32[1,32], index: 4, kind: input, shape index: {}]
  %s5 = inlined_call_operand.vmem [shape: f32[17], index: 5, kind: input, shape index: {}]
  %s6 = inlined_call_operand.vmem [shape: f32[2,32], index: 6, kind: output, shape index: {0}]
  %s7 = inlined_call_operand.vmem [shape: f32[2,16], index: 7, kind: output, shape index: {1}]
  %8 = xla_tuple %s6, %s7
  %s9 = sld [smem:[#allocation0]]
  $region46: #{cbam_forward.2} parent=0
    _
  %s11 = ssub.s32 1, %s9
  %s12 = scalar_select 0, %s11, %s9
  $region1: #{cbam_forward.2} parent=0
    #allocation2 [shape = 'u8[512]{0}', space=smem, size = 0x200, scoped, tag = 'input window, operand 5, single buffered']
    #allocation3 [shape = 's32[1]{0}', space=sflag, size = 0x4, scoped, tag = 'scoped memory for cbam_forward.2']
    %13 = vsyncpa [#allocation3], 0
    // Predicated region
    $region2: #{cbam_forward.2} parent=1 // pred_check
      _
    $region3: #{cbam_forward.2} parent=1 // pred_check_branch
      %15 = sbr.rel (0) target = $region5
    $region4: #{cbam_forward.2} parent=1 // pred_region
      _
    $region5: #{cbam_forward.2} parent=1 // pred_fallthru
      _
    // Predicated region
    $region6: #{cbam_forward.2} parent=1 // pred_check
      _
    $region7: #{cbam_forward.2} parent=1 // pred_check_branch
      %17 = sbr.rel (0) target = $region9
    $region8: #{cbam_forward.2} parent=1 // pred_region
      _
    $region9: #{cbam_forward.2} parent=1 // pred_fallthru
      _
    // Predicated region
    $region10: #{cbam_forward.2} parent=1 // pred_check
      _
    $region11: #{cbam_forward.2} parent=1 // pred_check_branch
      %19 = sbr.rel (0) target = $region13
    $region12: #{cbam_forward.2} parent=1 // pred_region
      _
    $region13: #{cbam_forward.2} parent=1 // pred_fallthru
      _
    // Predicated region
    $region14: #{cbam_forward.2} parent=1 // pred_check
      _
    $region15: #{cbam_forward.2} parent=1 // pred_check_branch
      %21 = sbr.rel (0) target = $region17
    $region16: #{cbam_forward.2} parent=1 // pred_region
      _
    $region17: #{cbam_forward.2} parent=1 // pred_fallthru
      _
    // Predicated region
    $region18: #{cbam_forward.2} parent=1 // pred_check
      _
    $region19: #{cbam_forward.2} parent=1 // pred_check_branch
      %23 = sbr.rel (0) target = $region21
    $region20: #{cbam_forward.2} parent=1 // pred_region
      _
    $region21: #{cbam_forward.2} parent=1 // pred_fallthru
      _
    // Predicated region
    $region22: #{cbam_forward.2} parent=1 // pred_check
      _
    $region23: #{cbam_forward.2} parent=1 // pred_check_branch
      %25 = sbr.rel (0) target = $region25
    $region24: #{cbam_forward.2} parent=1 // pred_region
      %s27 = ssub.s32 16, 16
      %28 = vsyncadd [#allocation3], %s27
      %s30 = sshll.u32 %s5, 4
      %s31 = int_to_ptr.vmem [resolvable:$true] %s30
      %33 = dma.vmem_to_smem %s31, 16, [#allocation2], [#allocation3]
    $region25: #{cbam_forward.2} parent=1 // pred_fallthru
      _
    // Predicated region
    $region26: #{cbam_forward.2} parent=1 // pred_check
      _
    $region27: #{cbam_forward.2} parent=1 // pred_check_branch
      %35 = sbr.rel (0) target = $region29
    $region28: #{cbam_forward.2} parent=1 // pred_region
      %36 = dma.done [#allocation3], 16
    $region29: #{cbam_forward.2} parent=1 // pred_fallthru
      _
    %37 = sfence
    %v38 = vld [vmem:[%s0] sm:$0xff]
    %v39 = vld [vmem:[%s0 + $0x8] sm:$0xff]
    %v40 = vld [vmem:[%s0 + $0x10] sm:$0xff]
    %v41 = vld [vmem:[%s0 + $0x18] sm:$0xff]
    %v42 = vld [vmem:[%s0 + $0x20] sm:$0xff]
    %v43 = vld [vmem:[%s0 + $0x28] sm:$0xff]
    %v44 = vld [vmem:[%s0 + $0x30] sm:$0xff]
    %v45 = vld [vmem:[%s0 + $0x38] sm:$0xff]
    %vm46 = vcmask 130048
    %v47 = vsel %vm46, %v38, 0.0
    %48 = vadd.xlane.f32.xlu0 %v47
    %v49 = vpop.xlane.xlu0 %48
    %v50 = vsel %vm46, %v39, 0.0
    %51 = vadd.xlane.f32.xlu0 %v50
    %v52 = vpop.xlane.xlu0 %51
    %v53 = vsel %vm46, %v40, 0.0
    %54 = vadd.xlane.f32.xlu0 %v53
    %v55 = vpop.xlane.xlu0 %54
    %v56 = vsel %vm46, %v41, 0.0
    %57 = vadd.xlane.f32.xlu0 %v56
    %v58 = vpop.xlane.xlu0 %57
    %v59 = vsel %vm46, %v42, 0.0
    %60 = vadd.xlane.f32.xlu0 %v59
    %v61 = vpop.xlane.xlu0 %60
    %v62 = vsel %vm46, %v43, 0.0
    %63 = vadd.xlane.f32.xlu0 %v62
    %v64 = vpop.xlane.xlu0 %63
    %v65 = vsel %vm46, %v44, 0.0
    %66 = vadd.xlane.f32.xlu0 %v65
    %v67 = vpop.xlane.xlu0 %66
    %v68 = vsel %vm46, %v45, 0.0
    %69 = vadd.xlane.f32.xlu0 %v68
    %v70 = vpop.xlane.xlu0 %69
    %v71 = vrcp.pop 16.0
    %v72 = vmul.f32 %v49, %v71
    %v73 = vmul.f32 %v52, %v71
    %v74 = vmul.f32 %v55, %v71
    %v75 = vmul.f32 %v58, %v71
    %v76 = vmul.f32 %v61, %v71
    %v77 = vmul.f32 %v64, %v71
    %v78 = vmul.f32 %v67, %v71
    %v79 = vmul.f32 %v70, %v71
    %v80 = vsel %vm46, %v38, -inf
    %81 = vmax.xlane.f32.xlu0 %v80
    %v82 = vpop.xlane.xlu0 %81
    %v83 = vsel %vm46, %v39, -inf
    %84 = vmax.xlane.f32.xlu0 %v83
    %v85 = vpop.xlane.xlu0 %84
    %v86 = vsel %vm46, %v40, -inf
    %87 = vmax.xlane.f32.xlu0 %v86
    %v88 = vpop.xlane.xlu0 %87
    %v89 = vsel %vm46, %v41, -inf
    %90 = vmax.xlane.f32.xlu0 %v89
    %v91 = vpop.xlane.xlu0 %90
    %v92 = vsel %vm46, %v42, -inf
    %93 = vmax.xlane.f32.xlu0 %v92
    %v94 = vpop.xlane.xlu0 %93
    %v95 = vsel %vm46, %v43, -inf
    %96 = vmax.xlane.f32.xlu0 %v95
    %v97 = vpop.xlane.xlu0 %96
    %v98 = vsel %vm46, %v44, -inf
    %99 = vmax.xlane.f32.xlu0 %v98
    %v100 = vpop.xlane.xlu0 %99
    %v101 = vsel %vm46, %v45, -inf
    %102 = vmax.xlane.f32.xlu0 %v101
    %v103 = vpop.xlane.xlu0 %102
    %v104 = vld [vmem:[%s1] sm:$0xff]
    %v105 = vld [vmem:[%s1 + $0x8] sm:$0xff]
    %v106 = vld [vmem:[%s1 + $0x10] sm:$0xff]
    %v107 = vld [vmem:[%s1 + $0x18] sm:$0xff]
    %v108 = vld [vmem:[%s2] sm:$0x1]
    %v110 = vlaneseq
    %v111 = vshrl.u32 %v110, 7
    %v112 = vsub.s32 0, %v111
    %v113 = vrot.slane %v108, %v112
    %v123 = vlaneseq
    %v124 = vand.u32 %v123, 127
    %v125 = vlaneseq
    %v126 = vshrl.u32 %v125, 7
    %v127 = vsub.s32 %v124, %v126
    %v128 = vrot.slane %v72, %v127
    %v129 = vadd.s32 %v124, 4294967288
    %v130 = vlaneseq
    %v131 = vshrl.u32 %v130, 7
    %v132 = vsub.s32 %v129, %v131
    %v133 = vrot.slane %v73, %v132
    %vm134 = vcmask 130112
    %v135 = vsel %vm134, %v133, %v128
    %v136 = vadd.s32 %v124, 4294967280
    %v137 = vlaneseq
    %v138 = vshrl.u32 %v137, 7
    %v139 = vsub.s32 %v136, %v138
    %v140 = vrot.slane %v74, %v139
    %vm141 = vcmask 195712
    %v142 = vsel %vm141, %v140, %v135
    %v143 = vadd.s32 %v124, 4294967272
    %v144 = vlaneseq
    %v145 = vshrl.u32 %v144, 7
    %v146 = vsub.s32 %v143, %v145
    %v147 = vrot.slane %v75, %v146
    %vm148 = vcmask 261312
    %v149 = vsel %vm148, %v147, %v142
    %v150 = vlaneseq
    %v151 = vshrl.u32 %v150, 7
    %v152 = vsub.s32 %v124, %v151
    %v153 = vrot.slane %v76, %v152
    %v154 = vlaneseq
    %v155 = vshrl.u32 %v154, 7
    %v156 = vsub.s32 %v129, %v155
    %v157 = vrot.slane %v77, %v156
    %v158 = vsel %vm134, %v157, %v153
    %v159 = vlaneseq
    %v160 = vshrl.u32 %v159, 7
    %v161 = vsub.s32 %v136, %v160
    %v162 = vrot.slane %v78, %v161
    %v163 = vsel %vm141, %v162, %v158
    %v164 = vlaneseq
    %v165 = vshrl.u32 %v164, 7
    %v166 = vsub.s32 %v143, %v165
    %v167 = vrot.slane %v79, %v166
    %v168 = vsel %vm148, %v167, %v163
    %vm169 = vcmask 1041409
    %v170 = vsel %vm169, %v168, %v149
    %vm171 = vcmask 261120
    %v172 = vsel %vm171, %v170, 0
    %174 = vmatprep.subr.mxu0 0.0
    %175 = vmatpush1.msra.mxu0 0.0
    %176 = vmatprep.subr.mxu0 0.0
    %177 = vmatpush1.msra.mxu0 0.0
    %178 = vmatprep.subr.mxu0 0.0
    %179 = vmatpush1.msra.mxu0 0.0
    %180 = vmatprep.subr.mxu0 0.0
    %181 = vmatpush1.msra.mxu0 0.0
    %182 = vmatprep.subr.mxu0 0.0
    %183 = vmatpush1.msra.mxu0 0.0
    %184 = vmatprep.subr.mxu0 0.0
    %185 = vmatpush1.msra.mxu0 0.0
    %186 = vmatprep.subr.mxu0 0.0
    %187 = vmatpush1.msra.mxu0 0.0
    %188 = vmatprep.subr.mxu0 0.0
    %189 = vmatpush1.msra.mxu0 0.0
    %190 = vmatprep.subr.mxu0 0.0
    %191 = vmatpush1.msra.mxu0 0.0
    %192 = vmatprep.subr.mxu0 0.0
    %193 = vmatpush1.msra.mxu0 0.0
    %194 = vmatprep.subr.mxu0 0.0
    %195 = vmatpush1.msra.mxu0 0.0
    %196 = vmatprep.subr.mxu0 0.0
    %197 = vmatpush1.msra.mxu0 0.0
    %198 = vmatprep.subr.mxu0 0.0
    %199 = vmatpush1.msra.mxu0 %v107
    %200 = vmatprep.subr.mxu0 0.0
    %201 = vmatpush1.msra.mxu0 %v106
    %202 = vmatprep.subr.mxu0 0.0
    %203 = vmatpush1.msra.mxu0 %v105
    %204 = vmatprep.subr.mxu0 0.0
    %205 = vmatpush1.msra.mxu0 %v104
    %206 = vmatprep.subr.mxu0 0.0
    %207 = vmatpush2.msra.mxu0 0.0
    %208 = vmatprep.subr.mxu0 0.0
    %209 = vmatpush2.msra.mxu0 0.0
    %210 = vmatprep.subr.mxu0 0.0
    %211 = vmatpush2.msra.mxu0 0.0
    %212 = vmatprep.subr.mxu0 0.0
    %213 = vmatpush2.msra.mxu0 0.0
    %214 = vmatprep.subr.mxu0 0.0
    %215 = vmatpush2.msra.mxu0 0.0
    %216 = vmatprep.subr.mxu0 0.0
    %217 = vmatpush2.msra.mxu0 0.0
    %218 = vmatprep.subr.mxu0 0.0
    %219 = vmatpush2.msra.mxu0 0.0
    %220 = vmatprep.subr.mxu0 0.0
    %221 = vmatpush2.msra.mxu0 0.0
    %222 = vmatprep.subr.mxu0 0.0
    %223 = vmatpush2.msra.mxu0 0.0
    %224 = vmatprep.subr.mxu0 0.0
    %225 = vmatpush2.msra.mxu0 0.0
    %226 = vmatprep.subr.mxu0 0.0
    %227 = vmatpush2.msra.mxu0 0.0
    %228 = vmatprep.subr.mxu0 0.0
    %229 = vmatpush2.msra.mxu0 0.0
    %230 = vmatprep.subr.mxu0 0.0
    %231 = vmatpush2.msra.mxu0 0.0
    %232 = vmatprep.subr.mxu0 0.0
    %233 = vmatpush2.msra.mxu0 0.0
    %234 = vmatprep.subr.mxu0 0.0
    %235 = vmatpush2.msra.mxu0 0.0
    %236 = vmatprep.subr.mxu0 0.0
    %237 = vmatpush2.msra.mxu0 0.0
    %238 = vmatprep.mubr.f32.mxu0 0.0
    %239 = vmatmul.mubr.f32.gmra.mxu0 %v172
    %v240 = vpop.f32.mrf.mxu0
    %v241 = vadd.f32 %v113, %v240
    %v242 = vpop.f32.mrf.mxu0
    %243 = vdwg.mxu0
    %v244 = vmax.f32 %v241, 0.0
    %v245 = vld [vmem:[%s3] sm:$0x3]
    %v246 = vld [vmem:[%s4] sm:$0x1]
    %v248 = vlaneseq
    %v249 = vshrl.u32 %v248, 7
    %v250 = vsub.s32 0, %v249
    %v251 = vrot.slane %v246, %v250
    %vm253 = vcmask 15360
    %v255 = vsel %vm253, %v244, 0
    %vm257 = vcmask 1041408
    %v259 = vsel %vm257, %v245, 0
    %261 = vmatprep.subr.mxu0 0.0
    %262 = vmatpush1.msra.mxu0 0.0
    %263 = vmatprep.subr.mxu0 0.0
    %264 = vmatpush1.msra.mxu0 0.0
    %265 = vmatprep.subr.mxu0 0.0
    %266 = vmatpush1.msra.mxu0 0.0
    %267 = vmatprep.subr.mxu0 0.0
    %268 = vmatpush1.msra.mxu0 0.0
    %269 = vmatprep.subr.mxu0 0.0
    %270 = vmatpush1.msra.mxu0 0.0
    %271 = vmatprep.subr.mxu0 0.0
    %272 = vmatpush1.msra.mxu0 0.0
    %273 = vmatprep.subr.mxu0 0.0
    %274 = vmatpush1.msra.mxu0 0.0
    %275 = vmatprep.subr.mxu0 0.0
    %276 = vmatpush1.msra.mxu0 0.0
    %277 = vmatprep.subr.mxu0 0.0
    %278 = vmatpush1.msra.mxu0 0.0
    %279 = vmatprep.subr.mxu0 0.0
    %280 = vmatpush1.msra.mxu0 0.0
    %281 = vmatprep.subr.mxu0 0.0
    %282 = vmatpush1.msra.mxu0 0.0
    %283 = vmatprep.subr.mxu0 0.0
    %284 = vmatpush1.msra.mxu0 0.0
    %285 = vmatprep.subr.mxu0 0.0
    %286 = vmatpush1.msra.mxu0 0.0
    %287 = vmatprep.subr.mxu0 0.0
    %288 = vmatpush1.msra.mxu0 0.0
    %289 = vmatprep.subr.mxu0 0.0
    %290 = vmatpush1.msra.mxu0 0.0
    %291 = vmatprep.subr.mxu0 0.0
    %292 = vmatpush1.msra.mxu0 %v259
    %293 = vmatprep.subr.mxu0 0.0
    %294 = vmatpush2.msra.mxu0 0.0
    %295 = vmatprep.subr.mxu0 0.0
    %296 = vmatpush2.msra.mxu0 0.0
    %297 = vmatprep.subr.mxu0 0.0
    %298 = vmatpush2.msra.mxu0 0.0
    %299 = vmatprep.subr.mxu0 0.0
    %300 = vmatpush2.msra.mxu0 0.0
    %301 = vmatprep.subr.mxu0 0.0
    %302 = vmatpush2.msra.mxu0 0.0
    %303 = vmatprep.subr.mxu0 0.0
    %304 = vmatpush2.msra.mxu0 0.0
    %305 = vmatprep.subr.mxu0 0.0
    %306 = vmatpush2.msra.mxu0 0.0
    %307 = vmatprep.subr.mxu0 0.0
    %308 = vmatpush2.msra.mxu0 0.0
    %309 = vmatprep.subr.mxu0 0.0
    %310 = vmatpush2.msra.mxu0 0.0
    %311 = vmatprep.subr.mxu0 0.0
    %312 = vmatpush2.msra.mxu0 0.0
    %313 = vmatprep.subr.mxu0 0.0
    %314 = vmatpush2.msra.mxu0 0.0
    %315 = vmatprep.subr.mxu0 0.0
    %316 = vmatpush2.msra.mxu0 0.0
    %317 = vmatprep.subr.mxu0 0.0
    %318 = vmatpush2.msra.mxu0 0.0
    %319 = vmatprep.subr.mxu0 0.0
    %320 = vmatpush2.msra.mxu0 0.0
    %321 = vmatprep.subr.mxu0 0.0
    %322 = vmatpush2.msra.mxu0 0.0
    %323 = vmatprep.subr.mxu0 0.0
    %324 = vmatpush2.msra.mxu0 0.0
    %325 = vmatprep.mubr.f32.mxu0 0.0
    %326 = vmatmul.mubr.f32.gmra.mxu0 %v255
    %v327 = vpop.f32.mrf.mxu0
    %v328 = vadd.f32 %v251, %v327
    %v329 = vpop.f32.mrf.mxu0
    %330 = vdwg.mxu0
    %v339 = vlaneseq
    %v340 = vshrl.u32 %v339, 7
    %v341 = vsub.s32 %v124, %v340
    %v342 = vrot.slane %v82, %v341
    %v343 = vlaneseq
    %v344 = vshrl.u32 %v343, 7
    %v345 = vsub.s32 %v129, %v344
    %v346 = vrot.slane %v85, %v345
    %v347 = vsel %vm134, %v346, %v342
    %v348 = vlaneseq
    %v349 = vshrl.u32 %v348, 7
    %v350 = vsub.s32 %v136, %v349
    %v351 = vrot.slane %v88, %v350
    %v352 = vsel %vm141, %v351, %v347
    %v353 = vlaneseq
    %v354 = vshrl.u32 %v353, 7
    %v355 = vsub.s32 %v143, %v354
    %v356 = vrot.slane %v91, %v355
    %v357 = vsel %vm148, %v356, %v352
    %v358 = vlaneseq
    %v359 = vshrl.u32 %v358, 7
    %v360 = vsub.s32 %v124, %v359
    %v361 = vrot.slane %v94, %v360
    %v362 = vlaneseq
    %v363 = vshrl.u32 %v362, 7
    %v364 = vsub.s32 %v129, %v363
    %v365 = vrot.slane %v97, %v364
    %v366 = vsel %vm134, %v365, %v361
    %v367 = vlaneseq
    %v368 = vshrl.u32 %v367, 7
    %v369 = vsub.s32 %v136, %v368
    %v370 = vrot.slane %v100, %v369
    %v371 = vsel %vm141, %v370, %v366
    %v372 = vlaneseq
    %v373 = vshrl.u32 %v372, 7
    %v374 = vsub.s32 %v143, %v373
    %v375 = vrot.slane %v103, %v374
    %v376 = vsel %vm148, %v375, %v371
    %v377 = vsel %vm169, %v376, %v357
    %v378 = vsel %vm171, %v377, 0
    %380 = vmatprep.subr.mxu0 0.0
    %381 = vmatpush1.msra.mxu0 0.0
    %382 = vmatprep.subr.mxu0 0.0
    %383 = vmatpush1.msra.mxu0 0.0
    %384 = vmatprep.subr.mxu0 0.0
    %385 = vmatpush1.msra.mxu0 0.0
    %386 = vmatprep.subr.mxu0 0.0
    %387 = vmatpush1.msra.mxu0 0.0
    %388 = vmatprep.subr.mxu0 0.0
    %389 = vmatpush1.msra.mxu0 0.0
    %390 = vmatprep.subr.mxu0 0.0
    %391 = vmatpush1.msra.mxu0 0.0
    %392 = vmatprep.subr.mxu0 0.0
    %393 = vmatpush1.msra.mxu0 0.0
    %394 = vmatprep.subr.mxu0 0.0
    %395 = vmatpush1.msra.mxu0 0.0
    %396 = vmatprep.subr.mxu0 0.0
    %397 = vmatpush1.msra.mxu0 0.0
    %398 = vmatprep.subr.mxu0 0.0
    %399 = vmatpush1.msra.mxu0 0.0
    %400 = vmatprep.subr.mxu0 0.0
    %401 = vmatpush1.msra.mxu0 0.0
    %402 = vmatprep.subr.mxu0 0.0
    %403 = vmatpush1.msra.mxu0 0.0
    %404 = vmatprep.subr.mxu0 0.0
    %405 = vmatpush1.msra.mxu0 %v107
    %406 = vmatprep.subr.mxu0 0.0
    %407 = vmatpush1.msra.mxu0 %v106
    %408 = vmatprep.subr.mxu0 0.0
    %409 = vmatpush1.msra.mxu0 %v105
    %410 = vmatprep.subr.mxu0 0.0
    %411 = vmatpush1.msra.mxu0 %v104
    %412 = vmatprep.subr.mxu0 0.0
    %413 = vmatpush2.msra.mxu0 0.0
    %414 = vmatprep.subr.mxu0 0.0
    %415 = vmatpush2.msra.mxu0 0.0
    %416 = vmatprep.subr.mxu0 0.0
    %417 = vmatpush2.msra.mxu0 0.0
    %418 = vmatprep.subr.mxu0 0.0
    %419 = vmatpush2.msra.mxu0 0.0
    %420 = vmatprep.subr.mxu0 0.0
    %421 = vmatpush2.msra.mxu0 0.0
    %422 = vmatprep.subr.mxu0 0.0
    %423 = vmatpush2.msra.mxu0 0.0
    %424 = vmatprep.subr.mxu0 0.0
    %425 = vmatpush2.msra.mxu0 0.0
    %426 = vmatprep.subr.mxu0 0.0
    %427 = vmatpush2.msra.mxu0 0.0
    %428 = vmatprep.subr.mxu0 0.0
    %429 = vmatpush2.msra.mxu0 0.0
    %430 = vmatprep.subr.mxu0 0.0
    %431 = vmatpush2.msra.mxu0 0.0
    %432 = vmatprep.subr.mxu0 0.0
    %433 = vmatpush2.msra.mxu0 0.0
    %434 = vmatprep.subr.mxu0 0.0
    %435 = vmatpush2.msra.mxu0 0.0
    %436 = vmatprep.subr.mxu0 0.0
    %437 = vmatpush2.msra.mxu0 0.0
    %438 = vmatprep.subr.mxu0 0.0
    %439 = vmatpush2.msra.mxu0 0.0
    %440 = vmatprep.subr.mxu0 0.0
    %441 = vmatpush2.msra.mxu0 0.0
    %442 = vmatprep.subr.mxu0 0.0
    %443 = vmatpush2.msra.mxu0 0.0
    %444 = vmatprep.mubr.f32.mxu0 0.0
    %445 = vmatmul.mubr.f32.gmra.mxu0 %v378
    %v446 = vpop.f32.mrf.mxu0
    %v447 = vadd.f32 %v113, %v446
    %v448 = vpop.f32.mrf.mxu0
    %449 = vdwg.mxu0
    %v450 = vmax.f32 %v447, 0.0
    %v452 = vsel %vm253, %v450, 0
    %454 = vmatprep.subr.mxu0 0.0
    %455 = vmatpush1.msra.mxu0 0.0
    %456 = vmatprep.subr.mxu0 0.0
    %457 = vmatpush1.msra.mxu0 0.0
    %458 = vmatprep.subr.mxu0 0.0
    %459 = vmatpush1.msra.mxu0 0.0
    %460 = vmatprep.subr.mxu0 0.0
    %461 = vmatpush1.msra.mxu0 0.0
    %462 = vmatprep.subr.mxu0 0.0
    %463 = vmatpush1.msra.mxu0 0.0
    %464 = vmatprep.subr.mxu0 0.0
    %465 = vmatpush1.msra.mxu0 0.0
    %466 = vmatprep.subr.mxu0 0.0
    %467 = vmatpush1.msra.mxu0 0.0
    %468 = vmatprep.subr.mxu0 0.0
    %469 = vmatpush1.msra.mxu0 0.0
    %470 = vmatprep.subr.mxu0 0.0
    %471 = vmatpush1.msra.mxu0 0.0
    %472 = vmatprep.subr.mxu0 0.0
    %473 = vmatpush1.msra.mxu0 0.0
    %474 = vmatprep.subr.mxu0 0.0
    %475 = vmatpush1.msra.mxu0 0.0
    %476 = vmatprep.subr.mxu0 0.0
    %477 = vmatpush1.msra.mxu0 0.0
    %478 = vmatprep.subr.mxu0 0.0
    %479 = vmatpush1.msra.mxu0 0.0
    %480 = vmatprep.subr.mxu0 0.0
    %481 = vmatpush1.msra.mxu0 0.0
    %482 = vmatprep.subr.mxu0 0.0
    %483 = vmatpush1.msra.mxu0 0.0
    %484 = vmatprep.subr.mxu0 0.0
    %485 = vmatpush1.msra.mxu0 %v259
    %486 = vmatprep.subr.mxu0 0.0
    %487 = vmatpush2.msra.mxu0 0.0
    %488 = vmatprep.subr.mxu0 0.0
    %489 = vmatpush2.msra.mxu0 0.0
    %490 = vmatprep.subr.mxu0 0.0
    %491 = vmatpush2.msra.mxu0 0.0
    %492 = vmatprep.subr.mxu0 0.0
    %493 = vmatpush2.msra.mxu0 0.0
    %494 = vmatprep.subr.mxu0 0.0
    %495 = vmatpush2.msra.mxu0 0.0
    %496 = vmatprep.subr.mxu0 0.0
    %497 = vmatpush2.msra.mxu0 0.0
    %498 = vmatprep.subr.mxu0 0.0
    %499 = vmatpush2.msra.mxu0 0.0
    %500 = vmatprep.subr.mxu0 0.0
    %501 = vmatpush2.msra.mxu0 0.0
    %502 = vmatprep.subr.mxu0 0.0
    %503 = vmatpush2.msra.mxu0 0.0
    %504 = vmatprep.subr.mxu0 0.0
    %505 = vmatpush2.msra.mxu0 0.0
    %506 = vmatprep.subr.mxu0 0.0
    %507 = vmatpush2.msra.mxu0 0.0
    %508 = vmatprep.subr.mxu0 0.0
    %509 = vmatpush2.msra.mxu0 0.0
    %510 = vmatprep.subr.mxu0 0.0
    %511 = vmatpush2.msra.mxu0 0.0
    %512 = vmatprep.subr.mxu0 0.0
    %513 = vmatpush2.msra.mxu0 0.0
    %514 = vmatprep.subr.mxu0 0.0
    %515 = vmatpush2.msra.mxu0 0.0
    %516 = vmatprep.subr.mxu0 0.0
    %517 = vmatpush2.msra.mxu0 0.0
    %518 = vmatprep.mubr.f32.mxu0 0.0
    %519 = vmatmul.mubr.f32.gmra.mxu0 %v452
    %v520 = vpop.f32.mrf.mxu0
    %v521 = vadd.f32 %v251, %v520
    %v522 = vpop.f32.mrf.mxu0
    %523 = vdwg.mxu0
    %v524 = vadd.f32 %v328, %v521
    %v525 = vxor.u32 %v524, 2147483648
    %v526 = vmul.f32 %v525, 1.442695
    %v527 = vpow.pop %v526
    %v528 = vadd.f32 %v527, 1.0
    %v529 = vrcp.pop %v528
    %v530 = vmul.f32 1.0, %v529
    %vm531 = vcmask 254976
    %532 = vst.msk [vmem:[%s6] sm:$0x3] %vm531, %v530
    %v533 = vlaneseq
    %v534 = vshrl.u32 %v533, 7
    %v535 = vsub.s32 0, %v534
    %v536 = vrot.slane %v530, %v535
    %538 = vbcast.lane.b32.xlu0 %v536, 256
    %v539 = vpop.permute.xlu0 %538
    %s541 = sor.u32 256, 8
    %542 = vbcast.lane.b32.xlu0 %v536, %s541
    %v543 = vpop.permute.xlu0 %542
    %s545 = sor.u32 256, 16
    %546 = vbcast.lane.b32.xlu0 %v536, %s545
    %v547 = vpop.permute.xlu0 %546
    %s549 = sor.u32 256, 24
    %550 = vbcast.lane.b32.xlu0 %v536, %s549
    %v551 = vpop.permute.xlu0 %550
    %v552 = vlaneseq
    %v553 = vshrl.u32 %v552, 7
    %v554 = vsub.s32 1, %v553
    %v555 = vrot.slane %v530, %v554
    %557 = vbcast.lane.b32.xlu0 %v555, 256
    %v558 = vpop.permute.xlu0 %557
    %s560 = sor.u32 256, 8
    %561 = vbcast.lane.b32.xlu0 %v555, %s560
    %v562 = vpop.permute.xlu0 %561
    %s564 = sor.u32 256, 16
    %565 = vbcast.lane.b32.xlu0 %v555, %s564
    %v566 = vpop.permute.xlu0 %565
    %s568 = sor.u32 256, 24
    %569 = vbcast.lane.b32.xlu0 %v555, %s568
    %v570 = vpop.permute.xlu0 %569
    %v571 = vmul.f32 %v38, %v539
    %v572 = vmul.f32 %v39, %v543
    %v573 = vmul.f32 %v40, %v547
    %v574 = vmul.f32 %v41, %v551
    %v575 = vmul.f32 %v42, %v558
    %v576 = vmul.f32 %v43, %v562
    %v577 = vmul.f32 %v44, %v566
    %v578 = vmul.f32 %v45, %v570
    %v579 = vsel %vm46, %v571, -inf
    %v580 = vsel %vm46, %v572, -inf
    %v581 = vsel %vm46, %v573, -inf
    %v582 = vmax.f32 %v579, %v581
    %v583 = vsel %vm46, %v574, -inf
    %v584 = vmax.f32 %v580, %v583
    %v585 = vmax.f32 %v582, %v584
    %v586 = vrot.slane %v585, 4
    %v587 = vmax.f32 %v585, %v586
    %v588 = vrot.slane %v587, 2
    %v589 = vmax.f32 %v587, %v588
    %v590 = vrot.slane %v589, 1
    %v591 = vmax.f32 %v589, %v590
    %v592 = vsel %vm46, %v575, -inf
    %v593 = vsel %vm46, %v576, -inf
    %v594 = vsel %vm46, %v577, -inf
    %v595 = vmax.f32 %v592, %v594
    %v596 = vsel %vm46, %v578, -inf
    %v597 = vmax.f32 %v593, %v596
    %v598 = vmax.f32 %v595, %v597
    %v599 = vrot.slane %v598, 4
    %v600 = vmax.f32 %v598, %v599
    %v601 = vrot.slane %v600, 2
    %v602 = vmax.f32 %v600, %v601
    %v603 = vrot.slane %v602, 1
    %v604 = vmax.f32 %v602, %v603
    %v605 = vsel %vm46, %v571, 0.0
    %v606 = vsel %vm46, %v572, 0.0
    %v607 = vadd.f32 %v605, %v606
    %v608 = vsel %vm46, %v573, 0.0
    %v609 = vadd.f32 %v607, %v608
    %v610 = vsel %vm46, %v574, 0.0
    %v611 = vadd.f32 %v609, %v610
    %v612 = vrot.slane %v611, 4
    %v613 = vadd.f32 %v611, %v612
    %v614 = vrot.slane %v613, 2
    %v615 = vadd.f32 %v613, %v614
    %v616 = vrot.slane %v615, 1
    %v617 = vadd.f32 %v615, %v616
    %v618 = vsel %vm46, %v575, 0.0
    %v619 = vsel %vm46, %v576, 0.0
    %v620 = vadd.f32 %v618, %v619
    %v621 = vsel %vm46, %v577, 0.0
    %v622 = vadd.f32 %v620, %v621
    %v623 = vsel %vm46, %v578, 0.0
    %v624 = vadd.f32 %v622, %v623
    %v625 = vrot.slane %v624, 4
    %v626 = vadd.f32 %v624, %v625
    %v627 = vrot.slane %v626, 2
    %v628 = vadd.f32 %v626, %v627
    %v629 = vrot.slane %v628, 1
    %v630 = vadd.f32 %v628, %v629
    %v631 = vrcp.pop 32.0
    %v632 = vmul.f32 %v617, %v631
    %v633 = vmul.f32 %v630, %v631
    %s634 = sld [smem:[#allocation2 + $0x10]]
    %v635 = vstv %s634
    %v636 = vadd.f32 %v635, 0.0
    %v639 = vsel %vm169, %v604, %v591
    %vm641 = vcmask 1047680
    %642 = vrot.lane.b32.xlu0 %v639, 16
    %v643 = vpop.permute.xlu0 %642
    %v644 = vsel %vm641, %v643, %v639
    %645 = vrot.lane.b32.xlu0 %v644, 16
    %v646 = vpop.permute.xlu0 %645
    %v647 = vsel %vm641, %v646, %v639
    %v650 = vsel %vm169, %v633, %v632
    %652 = vrot.lane.b32.xlu0 %v650, 16
    %v653 = vpop.permute.xlu0 %652
    %v654 = vsel %vm641, %v653, %v650
    %655 = vrot.lane.b32.xlu0 %v654, 16
    %v656 = vpop.permute.xlu0 %655
    %v657 = vsel %vm641, %v656, %v650
    %s658 = sld [smem:[#allocation2]]
    %v659 = vstv %s658
    %v660 = vmul.f32 %v659, %v647
    %s661 = sld [smem:[#allocation2 + $0x8]]
    %v662 = vstv %s661
    %v663 = vmul.f32 %v662, %v657
    %v664 = vadd.f32 %v660, %v663
    %v665 = vadd.s32 %v124, 4294967293
    %vm666 = vcmp.ge.s32.totalorder %v665, 0
    %vm667 = vcmp.lt.s32.totalorder %v665, 16
    %vm668 = vmand %vm666, %vm667
    %670 = vrot.lane.b32.xlu0 %v664, 115
    %v671 = vpop.permute.xlu0 %670
    %v673 = vsel %vm668, %v671, 0.0
    %v674 = vadd.f32 %v636, %v673
    %s675 = sld [smem:[#allocation2 + $0x1]]
    %v676 = vstv %s675
    %v677 = vmul.f32 %v676, %v647
    %s678 = sld [smem:[#allocation2 + $0x9]]
    %v679 = vstv %s678
    %v680 = vmul.f32 %v679, %v657
    %v681 = vadd.f32 %v677, %v680
    %v682 = vadd.s32 %v124, 4294967294
    %vm683 = vcmp.ge.s32.totalorder %v682, 0
    %vm684 = vcmp.lt.s32.totalorder %v682, 16
    %vm685 = vmand %vm683, %vm684
    %687 = vrot.lane.b32.xlu0 %v681, 114
    %v688 = vpop.permute.xlu0 %687
    %v690 = vsel %vm685, %v688, 0.0
    %v691 = vadd.f32 %v674, %v690
    %s692 = sld [smem:[#allocation2 + $0x2]]
    %v693 = vstv %s692
    %v694 = vmul.f32 %v693, %v647
    %s695 = sld [smem:[#allocation2 + $0xa]]
    %v696 = vstv %s695
    %v697 = vmul.f32 %v696, %v657
    %v698 = vadd.f32 %v694, %v697
    %v699 = vadd.s32 %v124, 4294967295
    %vm700 = vcmp.ge.s32.totalorder %v699, 0
    %vm701 = vcmp.lt.s32.totalorder %v699, 16
    %vm702 = vmand %vm700, %vm701
    %704 = vrot.lane.b32.xlu0 %v698, 113
    %v705 = vpop.permute.xlu0 %704
    %v707 = vsel %vm702, %v705, 0.0
    %v708 = vadd.f32 %v691, %v707
    %s709 = sld [smem:[#allocation2 + $0x3]]
    %v710 = vstv %s709
    %v711 = vmul.f32 %v710, %v591
    %v712 = vmul.f32 %v710, %v604
    %s713 = sld [smem:[#allocation2 + $0xb]]
    %v714 = vstv %s713
    %v715 = vmul.f32 %v714, %v632
    %v716 = vmul.f32 %v714, %v633
    %v717 = vadd.f32 %v711, %v715
    %v718 = vadd.f32 %v712, %v716
    %vm719 = vcmp.ge.s32.totalorder %v124, 0
    %vm720 = vcmp.lt.s32.totalorder %v124, 16
    %vm721 = vmand %vm719, %vm720
    %v724 = vsel %vm169, %v718, %v717
    %v726 = vsel %vm721, %v724, 0.0
    %v727 = vadd.f32 %v708, %v726
    %s728 = sld [smem:[#allocation2 + $0x4]]
    %v729 = vstv %s728
    %v730 = vmul.f32 %v729, %v647
    %s731 = sld [smem:[#allocation2 + $0xc]]
    %v732 = vstv %s731
    %v733 = vmul.f32 %v732, %v657
    %v734 = vadd.f32 %v730, %v733
    %v735 = vadd.s32 %v124, 1
    %vm736 = vcmp.ge.s32.totalorder %v735, 0
    %vm737 = vcmp.lt.s32.totalorder %v735, 16
    %vm738 = vmand %vm736, %vm737
    %740 = vrot.lane.b32.xlu0 %v734, 127
    %v741 = vpop.permute.xlu0 %740
    %v743 = vsel %vm738, %v741, 0.0
    %v744 = vadd.f32 %v727, %v743
    %s745 = sld [smem:[#allocation2 + $0x5]]
    %v746 = vstv %s745
    %v747 = vmul.f32 %v746, %v647
    %s748 = sld [smem:[#allocation2 + $0xd]]
    %v749 = vstv %s748
    %v750 = vmul.f32 %v749, %v657
    %v751 = vadd.f32 %v747, %v750
    %v752 = vadd.s32 %v124, 2
    %vm753 = vcmp.ge.s32.totalorder %v752, 0
    %vm754 = vcmp.lt.s32.totalorder %v752, 16
    %vm755 = vmand %vm753, %vm754
    %757 = vrot.lane.b32.xlu0 %v751, 126
    %v758 = vpop.permute.xlu0 %757
    %v760 = vsel %vm755, %v758, 0.0
    %v761 = vadd.f32 %v744, %v760
    %s762 = sld [smem:[#allocation2 + $0x6]]
    %v763 = vstv %s762
    %v764 = vmul.f32 %v763, %v647
    %s765 = sld [smem:[#allocation2 + $0xe]]
    %v766 = vstv %s765
    %v767 = vmul.f32 %v766, %v657
    %v768 = vadd.f32 %v764, %v767
    %v769 = vadd.s32 %v124, 3
    %vm770 = vcmp.ge.s32.totalorder %v769, 0
    %vm771 = vcmp.lt.s32.totalorder %v769, 16
    %vm772 = vmand %vm770, %vm771
    %774 = vrot.lane.b32.xlu0 %v768, 125
    %v775 = vpop.permute.xlu0 %774
    %v777 = vsel %vm772, %v775, 0.0
    %v778 = vadd.f32 %v761, %v777
    %s779 = sld [smem:[#allocation2 + $0x7]]
    %v780 = vstv %s779
    %v781 = vmul.f32 %v780, %v647
    %s782 = sld [smem:[#allocation2 + $0xf]]
    %v783 = vstv %s782
    %v784 = vmul.f32 %v783, %v657
    %v785 = vadd.f32 %v781, %v784
    %v786 = vadd.s32 %v124, 4
    %vm787 = vcmp.ge.s32.totalorder %v786, 0
    %vm788 = vcmp.lt.s32.totalorder %v786, 16
    %vm789 = vmand %vm787, %vm788
    %791 = vrot.lane.b32.xlu0 %v785, 124
    %v792 = vpop.permute.xlu0 %791
    %v794 = vsel %vm789, %v792, 0.0
    %v795 = vadd.f32 %v778, %v794
    %vm796 = vcmask 123904
    %797 = vst.msk [vmem:[%s7] sm:$0x3] %vm796, %v795
    // Predicated region
    $region30: #{cbam_forward.2} parent=1 // pred_check
      _
    $region31: #{cbam_forward.2} parent=1 // pred_check_branch
      %799 = sbr.rel (0) target = $region33
    $region32: #{cbam_forward.2} parent=1 // pred_region
      _
    $region33: #{cbam_forward.2} parent=1 // pred_fallthru
      _
    // Predicated region
    $region34: #{cbam_forward.2} parent=1 // pred_check
      _
    $region35: #{cbam_forward.2} parent=1 // pred_check_branch
      %801 = sbr.rel (0) target = $region37
    $region36: #{cbam_forward.2} parent=1 // pred_region
      _
    $region37: #{cbam_forward.2} parent=1 // pred_fallthru
      _
    // Predicated region
    $region38: #{cbam_forward.2} parent=1 // pred_check
      _
    $region39: #{cbam_forward.2} parent=1 // pred_check_branch
      %803 = sbr.rel (0) target = $region41
    $region40: #{cbam_forward.2} parent=1 // pred_region
      _
    $region41: #{cbam_forward.2} parent=1 // pred_fallthru
      _
    // Predicated region
    $region42: #{cbam_forward.2} parent=1 // pred_check
      _
    $region43: #{cbam_forward.2} parent=1 // pred_check_branch
      %805 = sbr.rel (0) target = $region45
    $region44: #{cbam_forward.2} parent=1 // pred_region
      _
    $region45: #{cbam_forward.2} parent=1 // pred_fallthru
      _
    %806 = vsyncpa [#allocation3], 1

</llo_original>
